<compile_context>
chip_gen: v6e
topology: v6e:2x2x1
jax: 0.10.0
libtpu: 0.0.40
codegen_flags: <defaults>
</compile_context>

<pallas_src>
import functools
import math

import jax
import jax.numpy as jnp
from jax.experimental import pallas as pl
from jax.experimental.pallas import tpu as pltpu


# ---------------------------------------------------------------------------
# Kernels
# ---------------------------------------------------------------------------
def _relu_conv_up_kernel_small(x_ref, w_ref, o_ref):
    """Small-channel path.
    x_ref: (TH, W*Cin)           lane-dense NHWC rows
    w_ref: (W*Cin, 2*W*2*Cout)   block-diagonal weight; width AND height x2 duplication folded in
    o_ref: (TH, 2*W*2*Cout)      lane-dense flattened upsampled rows
    """
    y = jnp.maximum(x_ref[...], 0.0)                                  # ReLU
    z = jnp.dot(y, w_ref[...],
                preferred_element_type=jnp.float32,
                precision=jax.lax.Precision.HIGHEST)
    o_ref[...] = z.astype(o_ref.dtype)                                # single dense store


def _relu_conv_up_kernel_general(x_ref, w_ref, o_ref):
    """General (large-channel) path.
    x_ref: (TH*W, Cin)
    w_ref: (Cin, 2*Cout)         [w | w]  (width duplication folded in)
    o_ref: (TH, 2, W, 2*Cout)    o[t, a, w, b*Cout + c] = out[n, 2h+a, 2w+b, c]
    On this path 2*Cout >= 128, so each slice store below is already a dense >=128-lane slab.
    """
    th, _, w_img, cout2 = o_ref.shape
    y = jnp.maximum(x_ref[...], 0.0)                                  # ReLU
    z = jnp.dot(y, w_ref[...],
                preferred_element_type=jnp.float32,
                precision=jax.lax.Precision.HIGHEST)                  # (TH*W, 2*Cout)
    z = z.reshape(th, w_img, cout2).astype(o_ref.dtype)               # split leading dim only
    o_ref[:, 0, :, :] = z                                             # output row 2h
    o_ref[:, 1, :, :] = z                                             # output row 2h+1


# ---------------------------------------------------------------------------
# Tiling helpers
# ---------------------------------------------------------------------------
def _round_up(x, m):
    return (x + m - 1) // m * m


def _vmem_budget_bytes():
    """Generation-aware VMEM budget: 48 MiB on 64-MiB-VMEM parts (v7x), 96 MiB on 128-MiB parts."""
    cap = 64 * 1024 * 1024
    try:
        cap = int(getattr(pltpu.get_tpu_info(), "vmem_capacity_bytes", cap))
    except Exception:
        pass
    if cap <= 64 * 1024 * 1024:
        return 48 * 1024 * 1024
    return 96 * 1024 * 1024


def _pick_rows_per_tile(rows, in_row_bytes, out_row_bytes, const_bytes, vmem_budget, th_multiple):
    """Image-rows per grid step.
       - double-buffered in+out blocks (+weights) fit the VMEM budget
       - output block targets ~4 MiB (amortizes the ~0.35 us per-step pipeline overhead)
       - prefers >= 4 grid steps (2 per v7x TensorCore) and an even step count
       - th is a multiple of `th_multiple` (layout alignment); partial last block handled by cdiv grid
    """
    if rows <= th_multiple:
        return int(rows)                       # block == full row dim -> always layout-legal
    per_row = in_row_bytes + out_row_bytes
    avail = max(vmem_budget - 2 * const_bytes, 2 * per_row)
    th_budget = max(1, avail // (2 * per_row))
    th_target = max(1, (4 * 1024 * 1024) // max(out_row_bytes, 1))
    th = max(1, min(th_budget, th_target, rows))
    # At least 4 steps so both v7x TensorCores get >= 2 pipelined steps.
    if pl.cdiv(rows, th) < 4 and rows >= 4:
        th = pl.cdiv(rows, 4)
    # Alignment.
    th = max(th_multiple, (th // th_multiple) * th_multiple)
    # Prefer an even number of steps (2 TensorCores on v7x).
    n = pl.cdiv(rows, th)
    if n > 1 and n % 2 == 1:
        alt = max(th_multiple, (pl.cdiv(rows, n + 1) // th_multiple) * th_multiple)
        if pl.cdiv(rows, alt) % 2 == 0:
            th = alt
    return int(th)


def _compiler_params(budget):
    return pltpu.CompilerParams(
        dimension_semantics=("parallel",),
        vmem_limit_bytes=int(budget),
    )


# ---------------------------------------------------------------------------
# Small-channel path: relu + conv + (x2,x2) upsample == one lane-dense matmul
# ---------------------------------------------------------------------------
def _small_path(x_nhwc, wmat, work_dtype):
    N, H, W, Cin = x_nhwc.shape
    Cout = wmat.shape[1]
    rows = N * H
    K = W * Cin                       # lane-dense input row width
    N2 = 2 * W * 2 * Cout             # lane-dense output row width (height dup, width dup folded in)
    dtb = jnp.dtype(work_dtype).itemsize

    x2 = x_nhwc.reshape(rows, K)      # metadata-only reshape of the NHWC array

    # Block-diagonal weight: Wbig[w*Cin+c, a*(W*2*Cout)+w'*(2*Cout)+b*Cout+co] = (w==w') * wmat[c,co]
    eye_w = jnp.eye(W, dtype=work_dtype)
    blk = eye_w[:, None, :, None] * wmat[None, :, None, :]                    # (W, Cin, W, Cout)
    wbig = jnp.broadcast_to(blk[:, :, None, :, None, :],
                            (W, Cin, 2, W, 2, Cout)).reshape(K, N2)

    in_row_bytes = _round_up(K, 128) * dtb
    out_row_bytes = _round_up(N2, 128) * dtb
    w_bytes = _round_up(K, 8) * _round_up(N2, 128) * dtb
    budget = _vmem_budget_bytes()
    th = _pick_rows_per_tile(rows, in_row_bytes, out_row_bytes, w_bytes,
                             int(budget * 0.75), th_multiple=8)
    grid = (pl.cdiv(rows, th),)

    flops = 2 * rows * K * N2
    bytes_accessed = rows * K * dtb + K * N2 * dtb + rows * N2 * dtb

    out2 = pl.pallas_call(
        _relu_conv_up_kernel_small,
        out_shape=jax.ShapeDtypeStruct((rows, N2), work_dtype),
        grid_spec=pltpu.PrefetchScalarGridSpec(
            num_scalar_prefetch=0,
            grid=grid,
            in_specs=[
                pl.BlockSpec((th, K), lambda i: (i, 0)),
                pl.BlockSpec((K, N2), lambda i: (0, 0)),     # constant index -> loaded once
            ],
            out_specs=pl.BlockSpec((th, N2), lambda i: (i, 0)),
        ),
        compiler_params=_compiler_params(budget),
        cost_estimate=pl.CostEstimate(flops=int(flops), transcendentals=0,
                                      bytes_accessed=int(bytes_accessed)),
    )(x2, wbig)

    # (rows, 2*(W*2*Cout)) -> (N, H, 2, W, 2, Cout) -> (N, 2H, 2W, Cout): pure metadata.
    return out2.reshape(N, H, 2, W, 2, Cout).reshape(N, 2 * H, 2 * W, Cout)


# ---------------------------------------------------------------------------
# General path: per-pixel matmul against [w | w]; used when 2*Cout >= 128 (already lane-dense)
# ---------------------------------------------------------------------------
def _general_path(x_nhwc, wmat, work_dtype):
    N, H, W, Cin = x_nhwc.shape
    Cout = wmat.shape[1]
    rows = N * H
    dtb = jnp.dtype(work_dtype).itemsize

    x_flat = x_nhwc.reshape(rows * W, Cin)                       # metadata-only reshape
    w_dup = jnp.concatenate([wmat, wmat], axis=1)                # (Cin, 2*Cout)

    in_row_bytes = W * _round_up(Cin, 128) * dtb                 # padded VMEM bytes / image row
    out_row_bytes = 2 * _round_up(W, 8) * _round_up(2 * Cout, 128) * dtb
    w_bytes = _round_up(Cin, 8) * _round_up(2 * Cout, 128) * dtb
    budget = _vmem_budget_bytes()
    th_mult = 8 // math.gcd(W, 8)                                # (th*W) % 8 == 0
    th = _pick_rows_per_tile(rows, in_row_bytes, out_row_bytes, w_bytes,
                             int(budget * 0.75), th_multiple=th_mult)
    tm = th * W
    grid = (pl.cdiv(rows, th),)

    flops = 2 * rows * W * Cin * (2 * Cout)
    bytes_accessed = rows * W * Cin * dtb + Cin * 2 * Cout * dtb + rows * 2 * W * 2 * Cout * dtb

    out5 = pl.pallas_call(
        _relu_conv_up_kernel_general,
        out_shape=jax.ShapeDtypeStruct((rows, 2, W, 2 * Cout), work_dtype),
        grid_spec=pltpu.PrefetchScalarGridSpec(
            num_scalar_prefetch=0,
            grid=grid,
            in_specs=[
                pl.BlockSpec((tm, Cin), lambda i: (i, 0)),
                pl.BlockSpec((Cin, 2 * Cout), lambda i: (0, 0)),  # constant index -> loaded once
            ],
            out_specs=pl.BlockSpec((th, 2, W, 2 * Cout), lambda i: (i, 0, 0, 0)),
        ),
        compiler_params=_compiler_params(budget),
        cost_estimate=pl.CostEstimate(flops=int(flops), transcendentals=0,
                                      bytes_accessed=int(bytes_accessed)),
    )(x_flat, w_dup)

    # (N*H, 2, W, 2*Cout) -> (N, 2H, 2W, Cout): pure metadata reshape.
    return out5.reshape(N, 2 * H, 2 * W, Cout)


# ---------------------------------------------------------------------------
# Wrappers
# ---------------------------------------------------------------------------
def transition_block_dy_nhwc(x_nhwc, w, *, force_path=None):
    """NHWC entry point (no layout plumbing): x (N,H,W,Cin), w (Cin,Cout) -> (N,2H,2W,Cout)."""
    assert force_path in (None, "small", "general")
    N, H, W, Cin = x_nhwc.shape
    assert w.shape[0] == Cin
    Cout = w.shape[1]

    xd = jnp.dtype(x_nhwc.dtype)
    work_dtype = xd if xd in (jnp.dtype(jnp.bfloat16), jnp.dtype(jnp.float32)) else jnp.dtype(jnp.float32)
    dtb = work_dtype.itemsize
    x_nhwc = x_nhwc.astype(work_dtype)
    wmat = w.astype(work_dtype)

    K, N2 = W * Cin, 2 * W * 2 * Cout
    use_small = (force_path == "small") or (
        force_path is None
        and 2 * Cout < 128                    # otherwise the general path is already lane-dense
        and K <= 1024                         # keeps the block-diagonal matmul safely memory-bound
        and K * N2 * dtb <= 4 * 1024 * 1024   # folded weight must stay small in VMEM
    )
    if use_small:
        return _small_path(x_nhwc, wmat, work_dtype)
    return _general_path(x_nhwc, wmat, work_dtype)


@functools.partial(jax.jit, static_argnames=("force_path",))
def transition_block_dy(x_nchw, w, *, force_path=None):
    """NCHW entry point matching the PyTorch module: x (N,Cin,H,W), w (Cin,Cout) -> (N,Cout,2H,2W).

    w is torch's ConvTranspose2d(in, out, 1, 1, 0, bias=False).weight[:, :, 0, 0].
    The two transposes below are layout plumbing required only by the NCHW contract; if the
    surrounding model is NHWC, call transition_block_dy_nhwc() and skip both HBM passes.
    """
    x_nhwc = jnp.transpose(x_nchw, (0, 2, 3, 1))
    out_nhwc = transition_block_dy_nhwc(x_nhwc, w, force_path=force_path)
    # TODO(synk): dropout for dropRate > 0 in training mode not implemented (default 0.0 -> no-op).
    return jnp.transpose(out_nhwc, (0, 3, 1, 2))


# ---------------------------------------------------------------------------
# Pure-JAX reference (for correctness check)
# ---------------------------------------------------------------------------
def _reference(x_nchw, w):
    y = jnp.maximum(x_nchw.astype(jnp.float32), 0.0)
    z = jnp.einsum("nchw,co->nohw", y, w.astype(jnp.float32),
                   precision=jax.lax.Precision.HIGHEST)
    return jnp.repeat(jnp.repeat(z, 2, axis=2), 2, axis=3)       # nearest x2


# ---------------------------------------------------------------------------
if __name__ == "__main__":
    key = jax.random.PRNGKey(0)
    k_x, k_w, k_x2, k_w2 = jax.random.split(key, 4)

    # Primary test shape (matches the module's typical small-channel use).
    N, in_planes, out_planes, H, W = 2, 4, 8, 16, 16
    x = jax.random.normal(k_x, (N, in_planes, H, W), jnp.float32)
    w = jax.random.normal(k_w, (in_planes, out_planes), jnp.float32) * 0.1
    ref = _reference(x, w)

    # (a) natural dispatch -> lane-dense small-channel path
    out_small = jax.block_until_ready(transition_block_dy(x, w))
    assert out_small.shape == (N, out_planes, 2 * H, 2 * W), out_small.shape
    assert jnp.allclose(out_small, ref, atol=5e-3, rtol=5e-3), "small path mismatch vs reference"

    # (b) same shape forced through the general path (coverage of the large-channel kernel)
    out_gen = jax.block_until_ready(transition_block_dy(x, w, force_path="general"))
    assert jnp.allclose(out_gen, ref, atol=5e-3, rtol=5e-3), "general path mismatch vs reference"

    # (c) a shape that naturally selects the general path (2*Cout >= 128)
    x_b = jax.random.normal(k_x2, (1, 8, 8, 8), jnp.float32)
    w_b = jax.random.normal(k_w2, (8, 64), jnp.float32) * 0.1
    out_b = jax.block_until_ready(transition_block_dy(x_b, w_b))
    assert out_b.shape == (1, 64, 16, 16), out_b.shape
    assert jnp.allclose(out_b, _reference(x_b, w_b), atol=5e-3, rtol=5e-3), "large-channel mismatch"

    print("KERNEL_OK")
</pallas_src>

<mosaic_0001>
module attributes {stable_mosaic.version = 11 : i64} {
  func.func @_relu_conv_up_kernel_small(%arg0: i32, %arg1: memref<8x64xf32, #tpu.memory_space<vmem>>, %arg2: memref<64x512xf32, #tpu.memory_space<vmem>>, %arg3: memref<8x512xf32, #tpu.memory_space<vmem>>) attributes {dimension_semantics = [#tpu.dimension_semantics<parallel>], iteration_bounds = array<i64: 4>, scalar_prefetch = 0 : i64, scratch_operands = 0 : i64, tpu.core_type = #tpu.core_type<tc>, window_params = [{transform_indices = @transform_0, window_bounds = array<i64: 8, 64>}, {pipeline_mode = #tpu.pipeline_mode<synchronous>, transform_indices = @transform_1, window_bounds = array<i64: 64, 512>}, {transform_indices = @transform_2, window_bounds = array<i64: 8, 512>}]} {
    %c0 = arith.constant 0 : index
    %c0_0 = arith.constant 0 : index
    %0 = vector.load %arg1[%c0, %c0_0] : memref<8x64xf32, #tpu.memory_space<vmem>>, vector<8x64xf32>
    %cst = arith.constant 0.000000e+00 : f32
    %1 = vector.broadcast %cst : f32 to vector<8x64xf32>
    %2 = arith.maximumf %0, %1 : vector<8x64xf32>
    %c0_1 = arith.constant 0 : index
    %c0_2 = arith.constant 0 : index
    %3 = vector.load %arg2[%c0_1, %c0_2] : memref<64x512xf32, #tpu.memory_space<vmem>>, vector<64x512xf32>
    %cst_3 = arith.constant dense<0.000000e+00> : vector<8x512xf32>
    %4 = tpu.matmul %2, %3, %cst_3 {dimension_numbers = #tpu.dot_dimension_numbers<[1], [0], [0], [1], [0, 0, 1, 1], [], []>, precision = #tpu.contract_precision<fp32>} : vector<8x64xf32>, vector<64x512xf32>, vector<8x512xf32> -> vector<8x512xf32>
    %c0_4 = arith.constant 0 : index
    %c0_5 = arith.constant 0 : index
    %5 = vector.load %arg3[%c0_4, %c0_5] : memref<8x512xf32, #tpu.memory_space<vmem>>, vector<8x512xf32>
    tpu.vector_store %arg3[%c0_4, %c0_5], %4 {strides = array<i32>} : memref<8x512xf32, #tpu.memory_space<vmem>>, vector<8x512xf32>,
    return
  }
  func.func @transform_0(%arg0: i32) -> (i32, i32) {
    %c0_i32 = arith.constant 0 : i32
    %c0_i32_0 = arith.constant 0 : i32
    return %arg0, %c0_i32 : i32, i32
  }
  func.func @transform_1(%arg0: i32) -> (i32, i32) {
    %c0_i32 = arith.constant 0 : i32
    %c0_i32_0 = arith.constant 0 : i32
    %c0_i32_1 = arith.constant 0 : i32
    return %c0_i32, %c0_i32_0 : i32, i32
  }
  func.func @transform_2(%arg0: i32) -> (i32, i32) {
    %c0_i32 = arith.constant 0 : i32
    %c0_i32_0 = arith.constant 0 : i32
    return %arg0, %c0_i32 : i32, i32
  }
}

</mosaic_0001>

<llo_original>
// kernel: transition_block_dy.1
$region0: #{transition_block_dy.1}
  #allocation0 [shape = 'u32[]', space=smem, size = 0x4, offset = 0x4, fixed_abs, tag = 'smem constant byte address 0x4 - core index']
  #allocation1 [shape = 'u32[144,128]{1,0:T(1,128)}', space=vmem, size = 0x12000, scoped, tag = 'internal scratch']
  %s0 = inlined_call_operand.vmem [shape: f32[32,64], index: 0, kind: input, shape index: {}]
  %s1 = inlined_call_operand.vmem [shape: f32[64,512], index: 1, kind: input, shape index: {}]
  %s2 = inlined_call_operand.vmem [shape: f32[32,512], index: 2, kind: output, shape index: {}]
  %s3 = sld [smem:[#allocation0]]
  $region41: #{transition_block_dy.1} parent=0
    _
  %s5 = ssub.s32 1, %s3
  %s6 = scalar_select 0, %s5, %s3
  loop: start=0, step=1, limit=6
  $region2: #{transition_block_dy.1} parent=0 // loop_pre_header
    _
  $region3: #{transition_block_dy.1} parent=0 // loop_header
    %s8 = sphi 0, %s12
    %p9 = scmp.ge.s32.totalorder %s8, 6
    %s18 = sphi 0, %s20
    %s21 = sphi 0, %s18
    %s22 = sphi 0, %s21
    %s38 = sphi 0, %s22
    %s42 = sphi 0, %s42
    %s44 = sphi 0, %s42
    %s45 = sphi 0, %s44
    %s59 = sphi 0, %s45
    %s65 = sphi 0, %s67
    %s68 = sphi 0, %s65
    %s69 = sphi 0, %s68
    %s85 = sphi 0, %s69
  $region4: #{transition_block_dy.1} parent=0 // loop_header_branch
    %11 = sbr.rel (%p9) target = $region8
  $region5: #{transition_block_dy.1} parent=0 // loop_body
    %s13 = ssub.s32 %s8, 1
    %s14 = ssub.s32 %s8, 2
    %s15 = sadd.s32 %s8, 1
    %s16 = ssub.s32 %s8, %s15
    %p17 = scmp.eq.s32.totalorder %s16, 0
    %s19 = sadd.s32 %s18, 1
    %s20 = scalar_select %p17, %s18, %s19
    %p23 = pneg %p17
    %p24 = scmp.eq.s32.totalorder %s8, 3
    %p25 = por %p23, %p24
    %p26 = scmp.ne.s32.totalorder %s18, %s21
    %p27 = scmp.eq.s32.totalorder %s8, 0
    %p28 = por %p26, %p27
    %p29 = scmp.ne.s32.totalorder %s18, %s21
    %p30 = scmp.eq.s32.totalorder %s13, 3
    %p31 = por %p29, %p30
    %p32 = scmp.ne.s32.totalorder %s21, %s22
    %p33 = scmp.eq.s32.totalorder %s13, 0
    %p34 = por %p32, %p33
    %p35 = scmp.ne.s32.totalorder %s21, %s22
    %p36 = scmp.eq.s32.totalorder %s14, 3
    %p37 = por %p35, %p36
    %p39 = scmp.ne.s32.totalorder %s22, %s38
    %p40 = scmp.eq.s32.totalorder %s14, 0
    %p41 = por %p39, %p40
    %s43 = sadd.s32 %s42, 1
    %p46 = scmp.eq.s32.totalorder %s8, 3
    %p47 = scmp.ne.s32.totalorder %s42, %s44
    %p48 = scmp.eq.s32.totalorder %s8, 0
    %p49 = por %p47, %p48
    %p50 = scmp.ne.s32.totalorder %s42, %s44
    %p51 = scmp.eq.s32.totalorder %s13, 3
    %p52 = por %p50, %p51
    %p53 = scmp.ne.s32.totalorder %s44, %s45
    %p54 = scmp.eq.s32.totalorder %s13, 0
    %p55 = por %p53, %p54
    %p56 = scmp.ne.s32.totalorder %s44, %s45
    %p57 = scmp.eq.s32.totalorder %s14, 3
    %p58 = por %p56, %p57
    %p60 = scmp.ne.s32.totalorder %s45, %s59
    %p61 = scmp.eq.s32.totalorder %s14, 0
    %p62 = por %p60, %p61
    %s63 = ssub.s32 %s8, %s15
    %p64 = scmp.eq.s32.totalorder %s63, 0
    %s66 = sadd.s32 %s65, 1
    %s67 = scalar_select %p64, %s65, %s66
    %p70 = pneg %p64
    %p71 = scmp.eq.s32.totalorder %s8, 3
    %p72 = por %p70, %p71
    %p73 = scmp.ne.s32.totalorder %s65, %s68
    %p74 = scmp.eq.s32.totalorder %s8, 0
    %p75 = por %p73, %p74
    %p76 = scmp.ne.s32.totalorder %s65, %s68
    %p77 = scmp.eq.s32.totalorder %s13, 3
    %p78 = por %p76, %p77
    %p79 = scmp.ne.s32.totalorder %s68, %s69
    %p80 = scmp.eq.s32.totalorder %s13, 0
    %p81 = por %p79, %p80
    %p82 = scmp.ne.s32.totalorder %s68, %s69
    %p83 = scmp.eq.s32.totalorder %s14, 3
    %p84 = por %p82, %p83
    %p86 = scmp.ne.s32.totalorder %s69, %s85
    %p87 = scmp.eq.s32.totalorder %s14, 0
    %p88 = por %p86, %p87
    %p89 = scmp.le.s32.totalorder 1, %s8
    %p90 = scmp.lt.s32.totalorder %s8, 5
    %p91 = pnand %p89, %p90
    %p92 = pneg %p91
    // Predicated region
    $region9: #{transition_block_dy.1} parent=5 // pred_check
      _
    $region10: #{transition_block_dy.1} parent=5 // pred_check_branch
      %94 = sbr.rel (%p91) target = $region12
    $region11: #{transition_block_dy.1} parent=5 // pred_region
      %s95 = ssub.s32 %s8, 1
      // Predicated region
      $region13: #{transition_block_dy.1} parent=11 // pred_check
        %p96 = pneg %p55
      $region14: #{transition_block_dy.1} parent=11 // pred_check_branch
        %98 = sbr.rel (%p96) target = $region16
      $region15: #{transition_block_dy.1} parent=11 // pred_region
        _
      $region16: #{transition_block_dy.1} parent=11 // pred_fallthru
        _
    $region12: #{transition_block_dy.1} parent=5 // pred_fallthru
      _
    %p99 = scmp.lt.s32.totalorder %s8, 4
    // Predicated region
    $region17: #{transition_block_dy.1} parent=5 // pred_check
      %p100 = pneg %p99
    $region18: #{transition_block_dy.1} parent=5 // pred_check_branch
      %102 = sbr.rel (%p100) target = $region20
    $region19: #{transition_block_dy.1} parent=5 // pred_region
      // Predicated region
      $region21: #{transition_block_dy.1} parent=19 // pred_check
        %p103 = pneg %p28
      $region22: #{transition_block_dy.1} parent=19 // pred_check_branch
        %105 = sbr.rel (%p103) target = $region24
      $region23: #{transition_block_dy.1} parent=19 // pred_region
        %p106 = scmp.lt.s32.totalorder %s8, 3
        %s107 = scalar_select %p106, %s8, 3
        %s108 = smul.addr %s107, 8
        %s109 = scalar_lea.vmem %s0, %s108
      $region24: #{transition_block_dy.1} parent=19 // pred_fallthru
        _
    $region20: #{transition_block_dy.1} parent=5 // pred_fallthru
      _
    %p110 = scmp.le.s32.totalorder 1, %s8
    %p111 = scmp.lt.s32.totalorder %s8, 5
    %p112 = pnand %p110, %p111
    %p113 = pneg %p112
    // Predicated region
    $region25: #{transition_block_dy.1} parent=5 // pred_check
      _
    $region26: #{transition_block_dy.1} parent=5 // pred_check_branch
      %115 = sbr.rel (%p112) target = $region28
    $region27: #{transition_block_dy.1} parent=5 // pred_region
      %s116 = ssub.s32 %s8, 1
      %p117 = scmp.lt.s32.totalorder %s13, 3
      %s118 = scalar_select %p117, %s13, 3
      %s119 = smul.addr %s118, 8
      %s120 = scalar_lea.vmem %s0, %s119
      %p121 = pneg %p34
      %p122 = pneg %p31
      %p123 = pneg %p55
      %p124 = pneg %p52
      %p125 = pneg %p81
      %p126 = pneg %p78
      %p127 = scmp.lt.s32.totalorder %s13, 3
      %s128 = scalar_select %p127, %s13, 3
      %s129 = smul.addr %s128, 4
      %s130 = smul.addr %s129, 8
      %s131 = scalar_lea.vmem %s2, %s130
      %p132 = scmp.lt.s32.totalorder %s13, 3
      %s133 = scalar_select %p132, %s13, 3
      %s134 = smul.addr %s133, 8
      %s135 = scalar_lea.vmem %s0, %s134
      %p136 = scmp.lt.s32.totalorder %s13, 3
      %s137 = scalar_select %p136, %s13, 3
      %s138 = smul.addr %s137, 4
      %s139 = smul.addr %s138, 8
      %s140 = scalar_lea.vmem %s2, %s139
      %v141 = vld [vmem:[%s135] sm:$0xff]
      %v142 = vmax.f32 %v141, 0.0
      %v143 = vld [vmem:[%s1] sm:$0xff]
      %v144 = vld [vmem:[%s1 + $0x8] sm:$0xff]
      %v145 = vld [vmem:[%s1 + $0x10] sm:$0xff]
      %v146 = vld [vmem:[%s1 + $0x18] sm:$0xff]
      %v147 = vld [vmem:[%s1 + $0x20] sm:$0xff]
      %v148 = vld [vmem:[%s1 + $0x28] sm:$0xff]
      %v149 = vld [vmem:[%s1 + $0x30] sm:$0xff]
      %v150 = vld [vmem:[%s1 + $0x38] sm:$0xff]
      %v151 = vld [vmem:[%s1 + $0x40] sm:$0xff]
      %v152 = vld [vmem:[%s1 + $0x48] sm:$0xff]
      %v153 = vld [vmem:[%s1 + $0x50] sm:$0xff]
      %v154 = vld [vmem:[%s1 + $0x58] sm:$0xff]
      %v155 = vld [vmem:[%s1 + $0x60] sm:$0xff]
      %v156 = vld [vmem:[%s1 + $0x68] sm:$0xff]
      %v157 = vld [vmem:[%s1 + $0x70] sm:$0xff]
      %v158 = vld [vmem:[%s1 + $0x78] sm:$0xff]
      %v159 = vld [vmem:[%s1 + $0x80] sm:$0xff]
      %v160 = vld [vmem:[%s1 + $0x88] sm:$0xff]
      %v161 = vld [vmem:[%s1 + $0x90] sm:$0xff]
      %v162 = vld [vmem:[%s1 + $0x98] sm:$0xff]
      %v163 = vld [vmem:[%s1 + $0xa0] sm:$0xff]
      %v164 = vld [vmem:[%s1 + $0xa8] sm:$0xff]
      %v165 = vld [vmem:[%s1 + $0xb0] sm:$0xff]
      %v166 = vld [vmem:[%s1 + $0xb8] sm:$0xff]
      %v167 = vld [vmem:[%s1 + $0xc0] sm:$0xff]
      %v168 = vld [vmem:[%s1 + $0xc8] sm:$0xff]
      %v169 = vld [vmem:[%s1 + $0xd0] sm:$0xff]
      %v170 = vld [vmem:[%s1 + $0xd8] sm:$0xff]
      %v171 = vld [vmem:[%s1 + $0xe0] sm:$0xff]
      %v172 = vld [vmem:[%s1 + $0xe8] sm:$0xff]
      %v173 = vld [vmem:[%s1 + $0xf0] sm:$0xff]
      %v174 = vld [vmem:[%s1 + $0xf8] sm:$0xff]
      %vm175 = vcmask 523264
      %v177 = vsel %vm175, %v142, 0
      %179 = vmatprep.subr.mxu0 0.0
      %180 = vmatpush1.msra.mxu0 0.0
      %181 = vmatprep.subr.mxu0 0.0
      %182 = vmatpush1.msra.mxu0 0.0
      %183 = vmatprep.subr.mxu0 0.0
      %184 = vmatpush1.msra.mxu0 0.0
      %185 = vmatprep.subr.mxu0 0.0
      %186 = vmatpush1.msra.mxu0 0.0
      %187 = vmatprep.subr.mxu0 0.0
      %188 = vmatpush1.msra.mxu0 0.0
      %189 = vmatprep.subr.mxu0 0.0
      %190 = vmatpush1.msra.mxu0 0.0
      %191 = vmatprep.subr.mxu0 0.0
      %192 = vmatpush1.msra.mxu0 0.0
      %193 = vmatprep.subr.mxu0 0.0
      %194 = vmatpush1.msra.mxu0 0.0
      %v195 = vand.u32 %v172, 4294901760
      %196 = vmatprep.subr.mxu0 %v195
      %v197 = vand.u32 %v171, 4294901760
      %198 = vmatpush1.msra.mxu0 %v197
      %v199 = vand.u32 %v168, 4294901760
      %200 = vmatprep.subr.mxu0 %v199
      %v201 = vand.u32 %v167, 4294901760
      %202 = vmatpush1.msra.mxu0 %v201
      %v203 = vand.u32 %v164, 4294901760
      %204 = vmatprep.subr.mxu0 %v203
      %v205 = vand.u32 %v163, 4294901760
      %206 = vmatpush1.msra.mxu0 %v205
      %v207 = vand.u32 %v160, 4294901760
      %208 = vmatprep.subr.mxu0 %v207
      %v209 = vand.u32 %v159, 4294901760
      %210 = vmatpush1.msra.mxu0 %v209
      %v211 = vand.u32 %v156, 4294901760
      %212 = vmatprep.subr.mxu0 %v211
      %v213 = vand.u32 %v155, 4294901760
      %214 = vmatpush1.msra.mxu0 %v213
      %v215 = vand.u32 %v152, 4294901760
      %216 = vmatprep.subr.mxu0 %v215
      %v217 = vand.u32 %v151, 4294901760
      %218 = vmatpush1.msra.mxu0 %v217
      %v219 = vand.u32 %v148, 4294901760
      %220 = vmatprep.subr.mxu0 %v219
      %v221 = vand.u32 %v147, 4294901760
      %222 = vmatpush1.msra.mxu0 %v221
      %v223 = vand.u32 %v144, 4294901760
      %224 = vmatprep.subr.mxu0 %v223
      %v225 = vand.u32 %v143, 4294901760
      %226 = vmatpush1.msra.mxu0 %v225
      %227 = vmatprep.subr.mxu0 0.0
      %228 = vmatpush2.msra.mxu0 0.0
      %229 = vmatprep.subr.mxu0 0.0
      %230 = vmatpush2.msra.mxu0 0.0
      %231 = vmatprep.subr.mxu0 0.0
      %232 = vmatpush2.msra.mxu0 0.0
      %233 = vmatprep.subr.mxu0 0.0
      %234 = vmatpush2.msra.mxu0 0.0
      %235 = vmatprep.subr.mxu0 0.0
      %236 = vmatpush2.msra.mxu0 0.0
      %237 = vmatprep.subr.mxu0 0.0
      %238 = vmatpush2.msra.mxu0 0.0
      %239 = vmatprep.subr.mxu0 0.0
      %240 = vmatpush2.msra.mxu0 0.0
      %241 = vmatprep.subr.mxu0 0.0
      %242 = vmatpush2.msra.mxu0 0.0
      %243 = vmatprep.subr.mxu0 0.0
      %244 = vmatpush2.msra.mxu0 0.0
      %245 = vmatprep.subr.mxu0 0.0
      %246 = vmatpush2.msra.mxu0 0.0
      %247 = vmatprep.subr.mxu0 0.0
      %248 = vmatpush2.msra.mxu0 0.0
      %249 = vmatprep.subr.mxu0 0.0
      %250 = vmatpush2.msra.mxu0 0.0
      %251 = vmatprep.subr.mxu0 0.0
      %252 = vmatpush2.msra.mxu0 0.0
      %253 = vmatprep.subr.mxu0 0.0
      %254 = vmatpush2.msra.mxu0 0.0
      %255 = vmatprep.subr.mxu0 0.0
      %256 = vmatpush2.msra.mxu0 0.0
      %257 = vmatprep.subr.mxu0 0.0
      %258 = vmatpush2.msra.mxu0 0.0
      %259 = vmatprep.mubr.f32.mxu0 0.0
      %v260 = vand.u32 %v177, 4294901760
      %v261 = vsub.f32 %v177, %v260
      %v262 = vand.u32 %v261, 4294901760
      %v263 = vsub.f32 %v261, %v262
      %v264 = vand.u32 %v263, 4294901760
      %265 = vmatmul.mubr.f32.gmra.mxu0 %v264
      %v266 = vpop.f32.mrf.mxu0
      %v267 = vadd.f32 0.0, %v266
      %v268 = vpop.f32.mrf.mxu0
      %v269 = vadd.f32 0.0, %v268
      %270 = vdwg.mxu0
      %271 = vmatprep.subr.mxu0 0.0
      %272 = vmatpush1.msra.mxu0 0.0
      %273 = vmatprep.subr.mxu0 0.0
      %274 = vmatpush1.msra.mxu0 0.0
      %275 = vmatprep.subr.mxu0 0.0
      %276 = vmatpush1.msra.mxu0 0.0
      %277 = vmatprep.subr.mxu0 0.0
      %278 = vmatpush1.msra.mxu0 0.0
      %279 = vmatprep.subr.mxu0 0.0
      %280 = vmatpush1.msra.mxu0 0.0
      %281 = vmatprep.subr.mxu0 0.0
      %282 = vmatpush1.msra.mxu0 0.0
      %283 = vmatprep.subr.mxu0 0.0
      %284 = vmatpush1.msra.mxu0 0.0
      %285 = vmatprep.subr.mxu0 0.0
      %286 = vmatpush1.msra.mxu0 0.0
      %v287 = vand.u32 %v172, 4294901760
      %v288 = vsub.f32 %v172, %v287
      %v289 = vand.u32 %v288, 4294901760
      %v290 = vsub.f32 %v288, %v289
      %v291 = vand.u32 %v290, 4294901760
      %292 = vmatprep.subr.mxu0 %v291
      %v293 = vand.u32 %v171, 4294901760
      %v294 = vsub.f32 %v171, %v293
      %v295 = vand.u32 %v294, 4294901760
      %v296 = vsub.f32 %v294, %v295
      %v297 = vand.u32 %v296, 4294901760
      %298 = vmatpush1.msra.mxu0 %v297
      %v299 = vand.u32 %v168, 4294901760
      %v300 = vsub.f32 %v168, %v299
      %v301 = vand.u32 %v300, 4294901760
      %v302 = vsub.f32 %v300, %v301
      %v303 = vand.u32 %v302, 4294901760
      %304 = vmatprep.subr.mxu0 %v303
      %v305 = vand.u32 %v167, 4294901760
      %v306 = vsub.f32 %v167, %v305
      %v307 = vand.u32 %v306, 4294901760
      %v308 = vsub.f32 %v306, %v307
      %v309 = vand.u32 %v308, 4294901760
      %310 = vmatpush1.msra.mxu0 %v309
      %v311 = vand.u32 %v164, 4294901760
      %v312 = vsub.f32 %v164, %v311
      %v313 = vand.u32 %v312, 4294901760
      %v314 = vsub.f32 %v312, %v313
      %v315 = vand.u32 %v314, 4294901760
      %316 = vmatprep.subr.mxu0 %v315
      %v317 = vand.u32 %v163, 4294901760
      %v318 = vsub.f32 %v163, %v317
      %v319 = vand.u32 %v318, 4294901760
      %v320 = vsub.f32 %v318, %v319
      %v321 = vand.u32 %v320, 4294901760
      %322 = vmatpush1.msra.mxu0 %v321
      %v323 = vand.u32 %v160, 4294901760
      %v324 = vsub.f32 %v160, %v323
      %v325 = vand.u32 %v324, 4294901760
      %v326 = vsub.f32 %v324, %v325
      %v327 = vand.u32 %v326, 4294901760
      %328 = vmatprep.subr.mxu0 %v327
      %v329 = vand.u32 %v159, 4294901760
      %v330 = vsub.f32 %v159, %v329
      %v331 = vand.u32 %v330, 4294901760
      %v332 = vsub.f32 %v330, %v331
      %v333 = vand.u32 %v332, 4294901760
      %334 = vmatpush1.msra.mxu0 %v333
      %v335 = vand.u32 %v156, 4294901760
      %v336 = vsub.f32 %v156, %v335
      %v337 = vand.u32 %v336, 4294901760
      %v338 = vsub.f32 %v336, %v337
      %v339 = vand.u32 %v338, 4294901760
      %340 = vmatprep.subr.mxu0 %v339
      %v341 = vand.u32 %v155, 4294901760
      %v342 = vsub.f32 %v155, %v341
      %v343 = vand.u32 %v342, 4294901760
      %v344 = vsub.f32 %v342, %v343
      %v345 = vand.u32 %v344, 4294901760
      %346 = vmatpush1.msra.mxu0 %v345
      %v347 = vand.u32 %v152, 4294901760
      %v348 = vsub.f32 %v152, %v347
      %v349 = vand.u32 %v348, 4294901760
      %v350 = vsub.f32 %v348, %v349
      %v351 = vand.u32 %v350, 4294901760
      %352 = vmatprep.subr.mxu0 %v351
      %v353 = vand.u32 %v151, 4294901760
      %v354 = vsub.f32 %v151, %v353
      %v355 = vand.u32 %v354, 4294901760
      %v356 = vsub.f32 %v354, %v355
      %v357 = vand.u32 %v356, 4294901760
      %358 = vmatpush1.msra.mxu0 %v357
      %v359 = vand.u32 %v148, 4294901760
      %v360 = vsub.f32 %v148, %v359
      %v361 = vand.u32 %v360, 4294901760
      %v362 = vsub.f32 %v360, %v361
      %v363 = vand.u32 %v362, 4294901760
      %364 = vmatprep.subr.mxu0 %v363
      %v365 = vand.u32 %v147, 4294901760
      %v366 = vsub.f32 %v147, %v365
      %v367 = vand.u32 %v366, 4294901760
      %v368 = vsub.f32 %v366, %v367
      %v369 = vand.u32 %v368, 4294901760
      %370 = vmatpush1.msra.mxu0 %v369
      %v371 = vand.u32 %v144, 4294901760
      %v372 = vsub.f32 %v144, %v371
      %v373 = vand.u32 %v372, 4294901760
      %v374 = vsub.f32 %v372, %v373
      %v375 = vand.u32 %v374, 4294901760
      %376 = vmatprep.subr.mxu0 %v375
      %v377 = vand.u32 %v143, 4294901760
      %v378 = vsub.f32 %v143, %v377
      %v379 = vand.u32 %v378, 4294901760
      %v380 = vsub.f32 %v378, %v379
      %v381 = vand.u32 %v380, 4294901760
      %382 = vmatpush1.msra.mxu0 %v381
      %383 = vmatprep.subr.mxu0 0.0
      %384 = vmatpush2.msra.mxu0 0.0
      %385 = vmatprep.subr.mxu0 0.0
      %386 = vmatpush2.msra.mxu0 0.0
      %387 = vmatprep.subr.mxu0 0.0
      %388 = vmatpush2.msra.mxu0 0.0
      %389 = vmatprep.subr.mxu0 0.0
      %390 = vmatpush2.msra.mxu0 0.0
      %391 = vmatprep.subr.mxu0 0.0
      %392 = vmatpush2.msra.mxu0 0.0
      %393 = vmatprep.subr.mxu0 0.0
      %394 = vmatpush2.msra.mxu0 0.0
      %395 = vmatprep.subr.mxu0 0.0
      %396 = vmatpush2.msra.mxu0 0.0
      %397 = vmatprep.subr.mxu0 0.0
      %398 = vmatpush2.msra.mxu0 0.0
      %399 = vmatprep.subr.mxu0 0.0
      %400 = vmatpush2.msra.mxu0 0.0
      %401 = vmatprep.subr.mxu0 0.0
      %402 = vmatpush2.msra.mxu0 0.0
      %403 = vmatprep.subr.mxu0 0.0
      %404 = vmatpush2.msra.mxu0 0.0
      %405 = vmatprep.subr.mxu0 0.0
      %406 = vmatpush2.msra.mxu0 0.0
      %407 = vmatprep.subr.mxu0 0.0
      %408 = vmatpush2.msra.mxu0 0.0
      %409 = vmatprep.subr.mxu0 0.0
      %410 = vmatpush2.msra.mxu0 0.0
      %411 = vmatprep.subr.mxu0 0.0
      %412 = vmatpush2.msra.mxu0 0.0
      %413 = vmatprep.subr.mxu0 0.0
      %414 = vmatpush2.msra.mxu0 0.0
      %415 = vmatprep.mubr.f32.mxu0 0.0
      %v416 = vand.u32 %v177, 4294901760
      %417 = vmatmul.mubr.f32.gmra.mxu0 %v416
      %v418 = vpop.f32.mrf.mxu0
      %v419 = vadd.f32 %v267, %v418
      %v420 = vpop.f32.mrf.mxu0
      %v421 = vadd.f32 %v269, %v420
      %422 = vdwg.mxu0
      %423 = vmatprep.subr.mxu0 0.0
      %424 = vmatpush1.msra.mxu0 0.0
      %425 = vmatprep.subr.mxu0 0.0
      %426 = vmatpush1.msra.mxu0 0.0
      %427 = vmatprep.subr.mxu0 0.0
      %428 = vmatpush1.msra.mxu0 0.0
      %429 = vmatprep.subr.mxu0 0.0
      %430 = vmatpush1.msra.mxu0 0.0
      %431 = vmatprep.subr.mxu0 0.0
      %432 = vmatpush1.msra.mxu0 0.0
      %433 = vmatprep.subr.mxu0 0.0
      %434 = vmatpush1.msra.mxu0 0.0
      %435 = vmatprep.subr.mxu0 0.0
      %436 = vmatpush1.msra.mxu0 0.0
      %437 = vmatprep.subr.mxu0 0.0
      %438 = vmatpush1.msra.mxu0 0.0
      %v439 = vand.u32 %v172, 4294901760
      %v440 = vsub.f32 %v172, %v439
      %441 = vmatprep.subr.mxu0 %v440
      %v442 = vand.u32 %v171, 4294901760
      %v443 = vsub.f32 %v171, %v442
      %444 = vmatpush1.msra.mxu0 %v443
      %v445 = vand.u32 %v168, 4294901760
      %v446 = vsub.f32 %v168, %v445
      %447 = vmatprep.subr.mxu0 %v446
      %v448 = vand.u32 %v167, 4294901760
      %v449 = vsub.f32 %v167, %v448
      %450 = vmatpush1.msra.mxu0 %v449
      %v451 = vand.u32 %v164, 4294901760
      %v452 = vsub.f32 %v164, %v451
      %453 = vmatprep.subr.mxu0 %v452
      %v454 = vand.u32 %v163, 4294901760
      %v455 = vsub.f32 %v163, %v454
      %456 = vmatpush1.msra.mxu0 %v455
      %v457 = vand.u32 %v160, 4294901760
      %v458 = vsub.f32 %v160, %v457
      %459 = vmatprep.subr.mxu0 %v458
      %v460 = vand.u32 %v159, 4294901760
      %v461 = vsub.f32 %v159, %v460
      %462 = vmatpush1.msra.mxu0 %v461
      %v463 = vand.u32 %v156, 4294901760
      %v464 = vsub.f32 %v156, %v463
      %465 = vmatprep.subr.mxu0 %v464
      %v466 = vand.u32 %v155, 4294901760
      %v467 = vsub.f32 %v155, %v466
      %468 = vmatpush1.msra.mxu0 %v467
      %v469 = vand.u32 %v152, 4294901760
      %v470 = vsub.f32 %v152, %v469
      %471 = vmatprep.subr.mxu0 %v470
      %v472 = vand.u32 %v151, 4294901760
      %v473 = vsub.f32 %v151, %v472
      %474 = vmatpush1.msra.mxu0 %v473
      %v475 = vand.u32 %v148, 4294901760
      %v476 = vsub.f32 %v148, %v475
      %477 = vmatprep.subr.mxu0 %v476
      %v478 = vand.u32 %v147, 4294901760
      %v479 = vsub.f32 %v147, %v478
      %480 = vmatpush1.msra.mxu0 %v479
      %v481 = vand.u32 %v144, 4294901760
      %v482 = vsub.f32 %v144, %v481
      %483 = vmatprep.subr.mxu0 %v482
      %v484 = vand.u32 %v143, 4294901760
      %v485 = vsub.f32 %v143, %v484
      %486 = vmatpush1.msra.mxu0 %v485
      %487 = vmatprep.subr.mxu0 0.0
      %488 = vmatpush2.msra.mxu0 0.0
      %489 = vmatprep.subr.mxu0 0.0
      %490 = vmatpush2.msra.mxu0 0.0
      %491 = vmatprep.subr.mxu0 0.0
      %492 = vmatpush2.msra.mxu0 0.0
      %493 = vmatprep.subr.mxu0 0.0
      %494 = vmatpush2.msra.mxu0 0.0
      %495 = vmatprep.subr.mxu0 0.0
      %496 = vmatpush2.msra.mxu0 0.0
      %497 = vmatprep.subr.mxu0 0.0
      %498 = vmatpush2.msra.mxu0 0.0
      %499 = vmatprep.subr.mxu0 0.0
      %500 = vmatpush2.msra.mxu0 0.0
      %501 = vmatprep.subr.mxu0 0.0
      %502 = vmatpush2.msra.mxu0 0.0
      %503 = vmatprep.subr.mxu0 0.0
      %504 = vmatpush2.msra.mxu0 0.0
      %505 = vmatprep.subr.mxu0 0.0
      %506 = vmatpush2.msra.mxu0 0.0
      %507 = vmatprep.subr.mxu0 0.0
      %508 = vmatpush2.msra.mxu0 0.0
      %509 = vmatprep.subr.mxu0 0.0
      %510 = vmatpush2.msra.mxu0 0.0
      %511 = vmatprep.subr.mxu0 0.0
      %512 = vmatpush2.msra.mxu0 0.0
      %513 = vmatprep.subr.mxu0 0.0
      %514 = vmatpush2.msra.mxu0 0.0
      %515 = vmatprep.subr.mxu0 0.0
      %516 = vmatpush2.msra.mxu0 0.0
      %517 = vmatprep.subr.mxu0 0.0
      %518 = vmatpush2.msra.mxu0 0.0
      %519 = vmatprep.mubr.f32.mxu0 0.0
      %v520 = vand.u32 %v177, 4294901760
      %v521 = vsub.f32 %v177, %v520
      %522 = vmatmul.mubr.f32.gmra.mxu0 %v521
      %v523 = vpop.f32.mrf.mxu0
      %v524 = vadd.f32 %v419, %v523
      %v525 = vpop.f32.mrf.mxu0
      %v526 = vadd.f32 %v421, %v525
      %527 = vdwg.mxu0
      %528 = vmatprep.subr.mxu0 0.0
      %529 = vmatpush1.msra.mxu0 0.0
      %530 = vmatprep.subr.mxu0 0.0
      %531 = vmatpush1.msra.mxu0 0.0
      %532 = vmatprep.subr.mxu0 0.0
      %533 = vmatpush1.msra.mxu0 0.0
      %534 = vmatprep.subr.mxu0 0.0
      %535 = vmatpush1.msra.mxu0 0.0
      %536 = vmatprep.subr.mxu0 0.0
      %537 = vmatpush1.msra.mxu0 0.0
      %538 = vmatprep.subr.mxu0 0.0
      %539 = vmatpush1.msra.mxu0 0.0
      %540 = vmatprep.subr.mxu0 0.0
      %541 = vmatpush1.msra.mxu0 0.0
      %542 = vmatprep.subr.mxu0 0.0
      %543 = vmatpush1.msra.mxu0 0.0
      %v544 = vand.u32 %v172, 4294901760
      %545 = vmatprep.subr.mxu0 %v544
      %v546 = vand.u32 %v171, 4294901760
      %547 = vmatpush1.msra.mxu0 %v546
      %v548 = vand.u32 %v168, 4294901760
      %549 = vmatprep.subr.mxu0 %v548
      %v550 = vand.u32 %v167, 4294901760
      %551 = vmatpush1.msra.mxu0 %v550
      %v552 = vand.u32 %v164, 4294901760
      %553 = vmatprep.subr.mxu0 %v552
      %v554 = vand.u32 %v163, 4294901760
      %555 = vmatpush1.msra.mxu0 %v554
      %v556 = vand.u32 %v160, 4294901760
      %557 = vmatprep.subr.mxu0 %v556
      %v558 = vand.u32 %v159, 4294901760
      %559 = vmatpush1.msra.mxu0 %v558
      %v560 = vand.u32 %v156, 4294901760
      %561 = vmatprep.subr.mxu0 %v560
      %v562 = vand.u32 %v155, 4294901760
      %563 = vmatpush1.msra.mxu0 %v562
      %v564 = vand.u32 %v152, 4294901760
      %565 = vmatprep.subr.mxu0 %v564
      %v566 = vand.u32 %v151, 4294901760
      %567 = vmatpush1.msra.mxu0 %v566
      %v568 = vand.u32 %v148, 4294901760
      %569 = vmatprep.subr.mxu0 %v568
      %v570 = vand.u32 %v147, 4294901760
      %571 = vmatpush1.msra.mxu0 %v570
      %v572 = vand.u32 %v144, 4294901760
      %573 = vmatprep.subr.mxu0 %v572
      %v574 = vand.u32 %v143, 4294901760
      %575 = vmatpush1.msra.mxu0 %v574
      %576 = vmatprep.subr.mxu0 0.0
      %577 = vmatpush2.msra.mxu0 0.0
      %578 = vmatprep.subr.mxu0 0.0
      %579 = vmatpush2.msra.mxu0 0.0
      %580 = vmatprep.subr.mxu0 0.0
      %581 = vmatpush2.msra.mxu0 0.0
      %582 = vmatprep.subr.mxu0 0.0
      %583 = vmatpush2.msra.mxu0 0.0
      %584 = vmatprep.subr.mxu0 0.0
      %585 = vmatpush2.msra.mxu0 0.0
      %586 = vmatprep.subr.mxu0 0.0
      %587 = vmatpush2.msra.mxu0 0.0
      %588 = vmatprep.subr.mxu0 0.0
      %589 = vmatpush2.msra.mxu0 0.0
      %590 = vmatprep.subr.mxu0 0.0
      %591 = vmatpush2.msra.mxu0 0.0
      %592 = vmatprep.subr.mxu0 0.0
      %593 = vmatpush2.msra.mxu0 0.0
      %594 = vmatprep.subr.mxu0 0.0
      %595 = vmatpush2.msra.mxu0 0.0
      %596 = vmatprep.subr.mxu0 0.0
      %597 = vmatpush2.msra.mxu0 0.0
      %598 = vmatprep.subr.mxu0 0.0
      %599 = vmatpush2.msra.mxu0 0.0
      %600 = vmatprep.subr.mxu0 0.0
      %601 = vmatpush2.msra.mxu0 0.0
      %602 = vmatprep.subr.mxu0 0.0
      %603 = vmatpush2.msra.mxu0 0.0
      %604 = vmatprep.subr.mxu0 0.0
      %605 = vmatpush2.msra.mxu0 0.0
      %606 = vmatprep.subr.mxu0 0.0
      %607 = vmatpush2.msra.mxu0 0.0
      %608 = vmatprep.mubr.f32.mxu0 0.0
      %v609 = vand.u32 %v177, 4294901760
      %v610 = vsub.f32 %v177, %v609
      %v611 = vand.u32 %v610, 4294901760
      %612 = vmatmul.mubr.f32.gmra.mxu0 %v611
      %v613 = vpop.f32.mrf.mxu0
      %v614 = vadd.f32 %v524, %v613
      %v615 = vpop.f32.mrf.mxu0
      %v616 = vadd.f32 %v526, %v615
      %617 = vdwg.mxu0
      %618 = vmatprep.subr.mxu0 0.0
      %619 = vmatpush1.msra.mxu0 0.0
      %620 = vmatprep.subr.mxu0 0.0
      %621 = vmatpush1.msra.mxu0 0.0
      %622 = vmatprep.subr.mxu0 0.0
      %623 = vmatpush1.msra.mxu0 0.0
      %624 = vmatprep.subr.mxu0 0.0
      %625 = vmatpush1.msra.mxu0 0.0
      %626 = vmatprep.subr.mxu0 0.0
      %627 = vmatpush1.msra.mxu0 0.0
      %628 = vmatprep.subr.mxu0 0.0
      %629 = vmatpush1.msra.mxu0 0.0
      %630 = vmatprep.subr.mxu0 0.0
      %631 = vmatpush1.msra.mxu0 0.0
      %632 = vmatprep.subr.mxu0 0.0
      %633 = vmatpush1.msra.mxu0 0.0
      %v634 = vand.u32 %v172, 4294901760
      %v635 = vsub.f32 %v172, %v634
      %v636 = vand.u32 %v635, 4294901760
      %637 = vmatprep.subr.mxu0 %v636
      %v638 = vand.u32 %v171, 4294901760
      %v639 = vsub.f32 %v171, %v638
      %v640 = vand.u32 %v639, 4294901760
      %641 = vmatpush1.msra.mxu0 %v640
      %v642 = vand.u32 %v168, 4294901760
      %v643 = vsub.f32 %v168, %v642
      %v644 = vand.u32 %v643, 4294901760
      %645 = vmatprep.subr.mxu0 %v644
      %v646 = vand.u32 %v167, 4294901760
      %v647 = vsub.f32 %v167, %v646
      %v648 = vand.u32 %v647, 4294901760
      %649 = vmatpush1.msra.mxu0 %v648
      %v650 = vand.u32 %v164, 4294901760
      %v651 = vsub.f32 %v164, %v650
      %v652 = vand.u32 %v651, 4294901760
      %653 = vmatprep.subr.mxu0 %v652
      %v654 = vand.u32 %v163, 4294901760
      %v655 = vsub.f32 %v163, %v654
      %v656 = vand.u32 %v655, 4294901760
      %657 = vmatpush1.msra.mxu0 %v656
      %v658 = vand.u32 %v160, 4294901760
      %v659 = vsub.f32 %v160, %v658
      %v660 = vand.u32 %v659, 4294901760
      %661 = vmatprep.subr.mxu0 %v660
      %v662 = vand.u32 %v159, 4294901760
      %v663 = vsub.f32 %v159, %v662
      %v664 = vand.u32 %v663, 4294901760
      %665 = vmatpush1.msra.mxu0 %v664
      %v666 = vand.u32 %v156, 4294901760
      %v667 = vsub.f32 %v156, %v666
      %v668 = vand.u32 %v667, 4294901760
      %669 = vmatprep.subr.mxu0 %v668
      %v670 = vand.u32 %v155, 4294901760
      %v671 = vsub.f32 %v155, %v670
      %v672 = vand.u32 %v671, 4294901760
      %673 = vmatpush1.msra.mxu0 %v672
      %v674 = vand.u32 %v152, 4294901760
      %v675 = vsub.f32 %v152, %v674
      %v676 = vand.u32 %v675, 4294901760
      %677 = vmatprep.subr.mxu0 %v676
      %v678 = vand.u32 %v151, 4294901760
      %v679 = vsub.f32 %v151, %v678
      %v680 = vand.u32 %v679, 4294901760
      %681 = vmatpush1.msra.mxu0 %v680
      %v682 = vand.u32 %v148, 4294901760
      %v683 = vsub.f32 %v148, %v682
      %v684 = vand.u32 %v683, 4294901760
      %685 = vmatprep.subr.mxu0 %v684
      %v686 = vand.u32 %v147, 4294901760
      %v687 = vsub.f32 %v147, %v686
      %v688 = vand.u32 %v687, 4294901760
      %689 = vmatpush1.msra.mxu0 %v688
      %v690 = vand.u32 %v144, 4294901760
      %v691 = vsub.f32 %v144, %v690
      %v692 = vand.u32 %v691, 4294901760
      %693 = vmatprep.subr.mxu0 %v692
      %v694 = vand.u32 %v143, 4294901760
      %v695 = vsub.f32 %v143, %v694
      %v696 = vand.u32 %v695, 4294901760
      %697 = vmatpush1.msra.mxu0 %v696
      %698 = vmatprep.subr.mxu0 0.0
      %699 = vmatpush2.msra.mxu0 0.0
      %700 = vmatprep.subr.mxu0 0.0
      %701 = vmatpush2.msra.mxu0 0.0
      %702 = vmatprep.subr.mxu0 0.0
      %703 = vmatpush2.msra.mxu0 0.0
      %704 = vmatprep.subr.mxu0 0.0
      %705 = vmatpush2.msra.mxu0 0.0
      %706 = vmatprep.subr.mxu0 0.0
      %707 = vmatpush2.msra.mxu0 0.0
      %708 = vmatprep.subr.mxu0 0.0
      %709 = vmatpush2.msra.mxu0 0.0
      %710 = vmatprep.subr.mxu0 0.0
      %711 = vmatpush2.msra.mxu0 0.0
      %712 = vmatprep.subr.mxu0 0.0
      %713 = vmatpush2.msra.mxu0 0.0
      %714 = vmatprep.subr.mxu0 0.0
      %715 = vmatpush2.msra.mxu0 0.0
      %716 = vmatprep.subr.mxu0 0.0
      %717 = vmatpush2.msra.mxu0 0.0
      %718 = vmatprep.subr.mxu0 0.0
      %719 = vmatpush2.msra.mxu0 0.0
      %720 = vmatprep.subr.mxu0 0.0
      %721 = vmatpush2.msra.mxu0 0.0
      %722 = vmatprep.subr.mxu0 0.0
      %723 = vmatpush2.msra.mxu0 0.0
      %724 = vmatprep.subr.mxu0 0.0
      %725 = vmatpush2.msra.mxu0 0.0
      %726 = vmatprep.subr.mxu0 0.0
      %727 = vmatpush2.msra.mxu0 0.0
      %728 = vmatprep.subr.mxu0 0.0
      %729 = vmatpush2.msra.mxu0 0.0
      %730 = vmatprep.mubr.f32.mxu0 0.0
      %v731 = vand.u32 %v177, 4294901760
      %732 = vmatmul.mubr.f32.gmra.mxu0 %v731
      %v733 = vpop.f32.mrf.mxu0
      %v734 = vadd.f32 %v614, %v733
      %v735 = vpop.f32.mrf.mxu0
      %v736 = vadd.f32 %v616, %v735
      %737 = vdwg.mxu0
      %738 = vmatprep.subr.mxu0 0.0
      %739 = vmatpush1.msra.mxu0 0.0
      %740 = vmatprep.subr.mxu0 0.0
      %741 = vmatpush1.msra.mxu0 0.0
      %742 = vmatprep.subr.mxu0 0.0
      %743 = vmatpush1.msra.mxu0 0.0
      %744 = vmatprep.subr.mxu0 0.0
      %745 = vmatpush1.msra.mxu0 0.0
      %746 = vmatprep.subr.mxu0 0.0
      %747 = vmatpush1.msra.mxu0 0.0
      %748 = vmatprep.subr.mxu0 0.0
      %749 = vmatpush1.msra.mxu0 0.0
      %750 = vmatprep.subr.mxu0 0.0
      %751 = vmatpush1.msra.mxu0 0.0
      %752 = vmatprep.subr.mxu0 0.0
      %753 = vmatpush1.msra.mxu0 0.0
      %v754 = vand.u32 %v172, 4294901760
      %755 = vmatprep.subr.mxu0 %v754
      %v756 = vand.u32 %v171, 4294901760
      %757 = vmatpush1.msra.mxu0 %v756
      %v758 = vand.u32 %v168, 4294901760
      %759 = vmatprep.subr.mxu0 %v758
      %v760 = vand.u32 %v167, 4294901760
      %761 = vmatpush1.msra.mxu0 %v760
      %v762 = vand.u32 %v164, 4294901760
      %763 = vmatprep.subr.mxu0 %v762
      %v764 = vand.u32 %v163, 4294901760
      %765 = vmatpush1.msra.mxu0 %v764
      %v766 = vand.u32 %v160, 4294901760
      %767 = vmatprep.subr.mxu0 %v766
      %v768 = vand.u32 %v159, 4294901760
      %769 = vmatpush1.msra.mxu0 %v768
      %v770 = vand.u32 %v156, 4294901760
      %771 = vmatprep.subr.mxu0 %v770
      %v772 = vand.u32 %v155, 4294901760
      %773 = vmatpush1.msra.mxu0 %v772
      %v774 = vand.u32 %v152, 4294901760
      %775 = vmatprep.subr.mxu0 %v774
      %v776 = vand.u32 %v151, 4294901760
      %777 = vmatpush1.msra.mxu0 %v776
      %v778 = vand.u32 %v148, 4294901760
      %779 = vmatprep.subr.mxu0 %v778
      %v780 = vand.u32 %v147, 4294901760
      %781 = vmatpush1.msra.mxu0 %v780
      %v782 = vand.u32 %v144, 4294901760
      %783 = vmatprep.subr.mxu0 %v782
      %v784 = vand.u32 %v143, 4294901760
      %785 = vmatpush1.msra.mxu0 %v784
      %786 = vmatprep.subr.mxu0 0.0
      %787 = vmatpush2.msra.mxu0 0.0
      %788 = vmatprep.subr.mxu0 0.0
      %789 = vmatpush2.msra.mxu0 0.0
      %790 = vmatprep.subr.mxu0 0.0
      %791 = vmatpush2.msra.mxu0 0.0
      %792 = vmatprep.subr.mxu0 0.0
      %793 = vmatpush2.msra.mxu0 0.0
      %794 = vmatprep.subr.mxu0 0.0
      %795 = vmatpush2.msra.mxu0 0.0
      %796 = vmatprep.subr.mxu0 0.0
      %797 = vmatpush2.msra.mxu0 0.0
      %798 = vmatprep.subr.mxu0 0.0
      %799 = vmatpush2.msra.mxu0 0.0
      %800 = vmatprep.subr.mxu0 0.0
      %801 = vmatpush2.msra.mxu0 0.0
      %802 = vmatprep.subr.mxu0 0.0
      %803 = vmatpush2.msra.mxu0 0.0
      %804 = vmatprep.subr.mxu0 0.0
      %805 = vmatpush2.msra.mxu0 0.0
      %806 = vmatprep.subr.mxu0 0.0
      %807 = vmatpush2.msra.mxu0 0.0
      %808 = vmatprep.subr.mxu0 0.0
      %809 = vmatpush2.msra.mxu0 0.0
      %810 = vmatprep.subr.mxu0 0.0
      %811 = vmatpush2.msra.mxu0 0.0
      %812 = vmatprep.subr.mxu0 0.0
      %813 = vmatpush2.msra.mxu0 0.0
      %814 = vmatprep.subr.mxu0 0.0
      %815 = vmatpush2.msra.mxu0 0.0
      %816 = vmatprep.subr.mxu0 0.0
      %817 = vmatpush2.msra.mxu0 0.0
      %818 = vmatprep.mubr.f32.mxu0 0.0
      %v819 = vand.u32 %v177, 4294901760
      %820 = vmatmul.mubr.f32.gmra.mxu0 %v819
      %v821 = vpop.f32.mrf.mxu0
      %v822 = vadd.f32 %v734, %v821
      %v823 = vpop.f32.mrf.mxu0
      %v824 = vadd.f32 %v736, %v823
      %825 = vdwg.mxu0
      %826 = vmatprep.subr.mxu0 0.0
      %827 = vmatpush1.msra.mxu0 0.0
      %828 = vmatprep.subr.mxu0 0.0
      %829 = vmatpush1.msra.mxu0 0.0
      %830 = vmatprep.subr.mxu0 0.0
      %831 = vmatpush1.msra.mxu0 0.0
      %832 = vmatprep.subr.mxu0 0.0
      %833 = vmatpush1.msra.mxu0 0.0
      %834 = vmatprep.subr.mxu0 0.0
      %835 = vmatpush1.msra.mxu0 0.0
      %836 = vmatprep.subr.mxu0 0.0
      %837 = vmatpush1.msra.mxu0 0.0
      %838 = vmatprep.subr.mxu0 0.0
      %839 = vmatpush1.msra.mxu0 0.0
      %840 = vmatprep.subr.mxu0 0.0
      %841 = vmatpush1.msra.mxu0 0.0
      %v842 = vand.u32 %v174, 4294901760
      %843 = vmatprep.subr.mxu0 %v842
      %v844 = vand.u32 %v173, 4294901760
      %845 = vmatpush1.msra.mxu0 %v844
      %v846 = vand.u32 %v170, 4294901760
      %847 = vmatprep.subr.mxu0 %v846
      %v848 = vand.u32 %v169, 4294901760
      %849 = vmatpush1.msra.mxu0 %v848
      %v850 = vand.u32 %v166, 4294901760
      %851 = vmatprep.subr.mxu0 %v850
      %v852 = vand.u32 %v165, 4294901760
      %853 = vmatpush1.msra.mxu0 %v852
      %v854 = vand.u32 %v162, 4294901760
      %855 = vmatprep.subr.mxu0 %v854
      %v856 = vand.u32 %v161, 4294901760
      %857 = vmatpush1.msra.mxu0 %v856
      %v858 = vand.u32 %v158, 4294901760
      %859 = vmatprep.subr.mxu0 %v858
      %v860 = vand.u32 %v157, 4294901760
      %861 = vmatpush1.msra.mxu0 %v860
      %v862 = vand.u32 %v154, 4294901760
      %863 = vmatprep.subr.mxu0 %v862
      %v864 = vand.u32 %v153, 4294901760
      %865 = vmatpush1.msra.mxu0 %v864
      %v866 = vand.u32 %v150, 4294901760
      %867 = vmatprep.subr.mxu0 %v866
      %v868 = vand.u32 %v149, 4294901760
      %869 = vmatpush1.msra.mxu0 %v868
      %v870 = vand.u32 %v146, 4294901760
      %871 = vmatprep.subr.mxu0 %v870
      %v872 = vand.u32 %v145, 4294901760
      %873 = vmatpush1.msra.mxu0 %v872
      %874 = vmatprep.subr.mxu0 0.0
      %875 = vmatpush2.msra.mxu0 0.0
      %876 = vmatprep.subr.mxu0 0.0
      %877 = vmatpush2.msra.mxu0 0.0
      %878 = vmatprep.subr.mxu0 0.0
      %879 = vmatpush2.msra.mxu0 0.0
      %880 = vmatprep.subr.mxu0 0.0
      %881 = vmatpush2.msra.mxu0 0.0
      %882 = vmatprep.subr.mxu0 0.0
      %883 = vmatpush2.msra.mxu0 0.0
      %884 = vmatprep.subr.mxu0 0.0
      %885 = vmatpush2.msra.mxu0 0.0
      %886 = vmatprep.subr.mxu0 0.0
      %887 = vmatpush2.msra.mxu0 0.0
      %888 = vmatprep.subr.mxu0 0.0
      %889 = vmatpush2.msra.mxu0 0.0
      %890 = vmatprep.subr.mxu0 0.0
      %891 = vmatpush2.msra.mxu0 0.0
      %892 = vmatprep.subr.mxu0 0.0
      %893 = vmatpush2.msra.mxu0 0.0
      %894 = vmatprep.subr.mxu0 0.0
      %895 = vmatpush2.msra.mxu0 0.0
      %896 = vmatprep.subr.mxu0 0.0
      %897 = vmatpush2.msra.mxu0 0.0
      %898 = vmatprep.subr.mxu0 0.0
      %899 = vmatpush2.msra.mxu0 0.0
      %900 = vmatprep.subr.mxu0 0.0
      %901 = vmatpush2.msra.mxu0 0.0
      %902 = vmatprep.subr.mxu0 0.0
      %903 = vmatpush2.msra.mxu0 0.0
      %904 = vmatprep.subr.mxu0 0.0
      %905 = vmatpush2.msra.mxu0 0.0
      %906 = vmatprep.mubr.f32.mxu0 0.0
      %v907 = vand.u32 %v177, 4294901760
      %v908 = vsub.f32 %v177, %v907
      %v909 = vand.u32 %v908, 4294901760
      %v910 = vsub.f32 %v908, %v909
      %v911 = vand.u32 %v910, 4294901760
      %912 = vmatmul.mubr.f32.gmra.mxu0 %v911
      %v913 = vpop.f32.mrf.mxu0
      %v914 = vadd.f32 0.0, %v913
      %v915 = vpop.f32.mrf.mxu0
      %v916 = vadd.f32 0.0, %v915
      %917 = vdwg.mxu0
      %918 = vmatprep.subr.mxu0 0.0
      %919 = vmatpush1.msra.mxu0 0.0
      %920 = vmatprep.subr.mxu0 0.0
      %921 = vmatpush1.msra.mxu0 0.0
      %922 = vmatprep.subr.mxu0 0.0
      %923 = vmatpush1.msra.mxu0 0.0
      %924 = vmatprep.subr.mxu0 0.0
      %925 = vmatpush1.msra.mxu0 0.0
      %926 = vmatprep.subr.mxu0 0.0
      %927 = vmatpush1.msra.mxu0 0.0
      %928 = vmatprep.subr.mxu0 0.0
      %929 = vmatpush1.msra.mxu0 0.0
      %930 = vmatprep.subr.mxu0 0.0
      %931 = vmatpush1.msra.mxu0 0.0
      %932 = vmatprep.subr.mxu0 0.0
      %933 = vmatpush1.msra.mxu0 0.0
      %v934 = vand.u32 %v174, 4294901760
      %v935 = vsub.f32 %v174, %v934
      %v936 = vand.u32 %v935, 4294901760
      %v937 = vsub.f32 %v935, %v936
      %v938 = vand.u32 %v937, 4294901760
      %939 = vmatprep.subr.mxu0 %v938
      %v940 = vand.u32 %v173, 4294901760
      %v941 = vsub.f32 %v173, %v940
      %v942 = vand.u32 %v941, 4294901760
      %v943 = vsub.f32 %v941, %v942
      %v944 = vand.u32 %v943, 4294901760
      %945 = vmatpush1.msra.mxu0 %v944
      %v946 = vand.u32 %v170, 4294901760
      %v947 = vsub.f32 %v170, %v946
      %v948 = vand.u32 %v947, 4294901760
      %v949 = vsub.f32 %v947, %v948
      %v950 = vand.u32 %v949, 4294901760
      %951 = vmatprep.subr.mxu0 %v950
      %v952 = vand.u32 %v169, 4294901760
      %v953 = vsub.f32 %v169, %v952
      %v954 = vand.u32 %v953, 4294901760
      %v955 = vsub.f32 %v953, %v954
      %v956 = vand.u32 %v955, 4294901760
      %957 = vmatpush1.msra.mxu0 %v956
      %v958 = vand.u32 %v166, 4294901760
      %v959 = vsub.f32 %v166, %v958
      %v960 = vand.u32 %v959, 4294901760
      %v961 = vsub.f32 %v959, %v960
      %v962 = vand.u32 %v961, 4294901760
      %963 = vmatprep.subr.mxu0 %v962
      %v964 = vand.u32 %v165, 4294901760
      %v965 = vsub.f32 %v165, %v964
      %v966 = vand.u32 %v965, 4294901760
      %v967 = vsub.f32 %v965, %v966
      %v968 = vand.u32 %v967, 4294901760
      %969 = vmatpush1.msra.mxu0 %v968
      %v970 = vand.u32 %v162, 4294901760
      %v971 = vsub.f32 %v162, %v970
      %v972 = vand.u32 %v971, 4294901760
      %v973 = vsub.f32 %v971, %v972
      %v974 = vand.u32 %v973, 4294901760
      %975 = vmatprep.subr.mxu0 %v974
      %v976 = vand.u32 %v161, 4294901760
      %v977 = vsub.f32 %v161, %v976
      %v978 = vand.u32 %v977, 4294901760
      %v979 = vsub.f32 %v977, %v978
      %v980 = vand.u32 %v979, 4294901760
      %981 = vmatpush1.msra.mxu0 %v980
      %v982 = vand.u32 %v158, 4294901760
      %v983 = vsub.f32 %v158, %v982
      %v984 = vand.u32 %v983, 4294901760
      %v985 = vsub.f32 %v983, %v984
      %v986 = vand.u32 %v985, 4294901760
      %987 = vmatprep.subr.mxu0 %v986
      %v988 = vand.u32 %v157, 4294901760
      %v989 = vsub.f32 %v157, %v988
      %v990 = vand.u32 %v989, 4294901760
      %v991 = vsub.f32 %v989, %v990
      %v992 = vand.u32 %v991, 4294901760
      %993 = vmatpush1.msra.mxu0 %v992
      %v994 = vand.u32 %v154, 4294901760
      %v995 = vsub.f32 %v154, %v994
      %v996 = vand.u32 %v995, 4294901760
      %v997 = vsub.f32 %v995, %v996
      %v998 = vand.u32 %v997, 4294901760
      %999 = vmatprep.subr.mxu0 %v998
      %v1000 = vand.u32 %v153, 4294901760
      %v1001 = vsub.f32 %v153, %v1000
      %v1002 = vand.u32 %v1001, 4294901760
      %v1003 = vsub.f32 %v1001, %v1002
      %v1004 = vand.u32 %v1003, 4294901760
      %1005 = vmatpush1.msra.mxu0 %v1004
      %v1006 = vand.u32 %v150, 4294901760
      %v1007 = vsub.f32 %v150, %v1006
      %v1008 = vand.u32 %v1007, 4294901760
      %v1009 = vsub.f32 %v1007, %v1008
      %v1010 = vand.u32 %v1009, 4294901760
      %1011 = vmatprep.subr.mxu0 %v1010
      %v1012 = vand.u32 %v149, 4294901760
      %v1013 = vsub.f32 %v149, %v1012
      %v1014 = vand.u32 %v1013, 4294901760
      %v1015 = vsub.f32 %v1013, %v1014
      %v1016 = vand.u32 %v1015, 4294901760
      %1017 = vmatpush1.msra.mxu0 %v1016
      %v1018 = vand.u32 %v146, 4294901760
      %v1019 = vsub.f32 %v146, %v1018
      %v1020 = vand.u32 %v1019, 4294901760
      %v1021 = vsub.f32 %v1019, %v1020
      %v1022 = vand.u32 %v1021, 4294901760
      %1023 = vmatprep.subr.mxu0 %v1022
      %v1024 = vand.u32 %v145, 4294901760
      %v1025 = vsub.f32 %v145, %v1024
      %v1026 = vand.u32 %v1025, 4294901760
      %v1027 = vsub.f32 %v1025, %v1026
      %v1028 = vand.u32 %v1027, 4294901760
      %1029 = vmatpush1.msra.mxu0 %v1028
      %1030 = vmatprep.subr.mxu0 0.0
      %1031 = vmatpush2.msra.mxu0 0.0
      %1032 = vmatprep.subr.mxu0 0.0
      %1033 = vmatpush2.msra.mxu0 0.0
      %1034 = vmatprep.subr.mxu0 0.0
      %1035 = vmatpush2.msra.mxu0 0.0
      %1036 = vmatprep.subr.mxu0 0.0
      %1037 = vmatpush2.msra.mxu0 0.0
      %1038 = vmatprep.subr.mxu0 0.0
      %1039 = vmatpush2.msra.mxu0 0.0
      %1040 = vmatprep.subr.mxu0 0.0
      %1041 = vmatpush2.msra.mxu0 0.0
      %1042 = vmatprep.subr.mxu0 0.0
      %1043 = vmatpush2.msra.mxu0 0.0
      %1044 = vmatprep.subr.mxu0 0.0
      %1045 = vmatpush2.msra.mxu0 0.0
      %1046 = vmatprep.subr.mxu0 0.0
      %1047 = vmatpush2.msra.mxu0 0.0
      %1048 = vmatprep.subr.mxu0 0.0
      %1049 = vmatpush2.msra.mxu0 0.0
      %1050 = vmatprep.subr.mxu0 0.0
      %1051 = vmatpush2.msra.mxu0 0.0
      %1052 = vmatprep.subr.mxu0 0.0
      %1053 = vmatpush2.msra.mxu0 0.0
      %1054 = vmatprep.subr.mxu0 0.0
      %1055 = vmatpush2.msra.mxu0 0.0
      %1056 = vmatprep.subr.mxu0 0.0
      %1057 = vmatpush2.msra.mxu0 0.0
      %1058 = vmatprep.subr.mxu0 0.0
      %1059 = vmatpush2.msra.mxu0 0.0
      %1060 = vmatprep.subr.mxu0 0.0
      %1061 = vmatpush2.msra.mxu0 0.0
      %1062 = vmatprep.mubr.f32.mxu0 0.0
      %v1063 = vand.u32 %v177, 4294901760
      %1064 = vmatmul.mubr.f32.gmra.mxu0 %v1063
      %v1065 = vpop.f32.mrf.mxu0
      %v1066 = vadd.f32 %v914, %v1065
      %v1067 = vpop.f32.mrf.mxu0
      %v1068 = vadd.f32 %v916, %v1067
      %1069 = vdwg.mxu0
      %1070 = vmatprep.subr.mxu0 0.0
      %1071 = vmatpush1.msra.mxu0 0.0
      %1072 = vmatprep.subr.mxu0 0.0
      %1073 = vmatpush1.msra.mxu0 0.0
      %1074 = vmatprep.subr.mxu0 0.0
      %1075 = vmatpush1.msra.mxu0 0.0
      %1076 = vmatprep.subr.mxu0 0.0
      %1077 = vmatpush1.msra.mxu0 0.0
      %1078 = vmatprep.subr.mxu0 0.0
      %1079 = vmatpush1.msra.mxu0 0.0
      %1080 = vmatprep.subr.mxu0 0.0
      %1081 = vmatpush1.msra.mxu0 0.0
      %1082 = vmatprep.subr.mxu0 0.0
      %1083 = vmatpush1.msra.mxu0 0.0
      %1084 = vmatprep.subr.mxu0 0.0
      %1085 = vmatpush1.msra.mxu0 0.0
      %v1086 = vand.u32 %v174, 4294901760
      %v1087 = vsub.f32 %v174, %v1086
      %1088 = vmatprep.subr.mxu0 %v1087
      %v1089 = vand.u32 %v173, 4294901760
      %v1090 = vsub.f32 %v173, %v1089
      %1091 = vmatpush1.msra.mxu0 %v1090
      %v1092 = vand.u32 %v170, 4294901760
      %v1093 = vsub.f32 %v170, %v1092
      %1094 = vmatprep.subr.mxu0 %v1093
      %v1095 = vand.u32 %v169, 4294901760
      %v1096 = vsub.f32 %v169, %v1095
      %1097 = vmatpush1.msra.mxu0 %v1096
      %v1098 = vand.u32 %v166, 4294901760
      %v1099 = vsub.f32 %v166, %v1098
      %1100 = vmatprep.subr.mxu0 %v1099
      %v1101 = vand.u32 %v165, 4294901760
      %v1102 = vsub.f32 %v165, %v1101
      %1103 = vmatpush1.msra.mxu0 %v1102
      %v1104 = vand.u32 %v162, 4294901760
      %v1105 = vsub.f32 %v162, %v1104
      %1106 = vmatprep.subr.mxu0 %v1105
      %v1107 = vand.u32 %v161, 4294901760
      %v1108 = vsub.f32 %v161, %v1107
      %1109 = vmatpush1.msra.mxu0 %v1108
      %v1110 = vand.u32 %v158, 4294901760
      %v1111 = vsub.f32 %v158, %v1110
      %1112 = vmatprep.subr.mxu0 %v1111
      %v1113 = vand.u32 %v157, 4294901760
      %v1114 = vsub.f32 %v157, %v1113
      %1115 = vmatpush1.msra.mxu0 %v1114
      %v1116 = vand.u32 %v154, 4294901760
      %v1117 = vsub.f32 %v154, %v1116
      %1118 = vmatprep.subr.mxu0 %v1117
      %v1119 = vand.u32 %v153, 4294901760
      %v1120 = vsub.f32 %v153, %v1119
      %1121 = vmatpush1.msra.mxu0 %v1120
      %v1122 = vand.u32 %v150, 4294901760
      %v1123 = vsub.f32 %v150, %v1122
      %1124 = vmatprep.subr.mxu0 %v1123
      %v1125 = vand.u32 %v149, 4294901760
      %v1126 = vsub.f32 %v149, %v1125
      %1127 = vmatpush1.msra.mxu0 %v1126
      %v1128 = vand.u32 %v146, 4294901760
      %v1129 = vsub.f32 %v146, %v1128
      %1130 = vmatprep.subr.mxu0 %v1129
      %v1131 = vand.u32 %v145, 4294901760
      %v1132 = vsub.f32 %v145, %v1131
      %1133 = vmatpush1.msra.mxu0 %v1132
      %1134 = vmatprep.subr.mxu0 0.0
      %1135 = vmatpush2.msra.mxu0 0.0
      %1136 = vmatprep.subr.mxu0 0.0
      %1137 = vmatpush2.msra.mxu0 0.0
      %1138 = vmatprep.subr.mxu0 0.0
      %1139 = vmatpush2.msra.mxu0 0.0
      %1140 = vmatprep.subr.mxu0 0.0
      %1141 = vmatpush2.msra.mxu0 0.0
      %1142 = vmatprep.subr.mxu0 0.0
      %1143 = vmatpush2.msra.mxu0 0.0
      %1144 = vmatprep.subr.mxu0 0.0
      %1145 = vmatpush2.msra.mxu0 0.0
      %1146 = vmatprep.subr.mxu0 0.0
      %1147 = vmatpush2.msra.mxu0 0.0
      %1148 = vmatprep.subr.mxu0 0.0
      %1149 = vmatpush2.msra.mxu0 0.0
      %1150 = vmatprep.subr.mxu0 0.0
      %1151 = vmatpush2.msra.mxu0 0.0
      %1152 = vmatprep.subr.mxu0 0.0
      %1153 = vmatpush2.msra.mxu0 0.0
      %1154 = vmatprep.subr.mxu0 0.0
      %1155 = vmatpush2.msra.mxu0 0.0
      %1156 = vmatprep.subr.mxu0 0.0
      %1157 = vmatpush2.msra.mxu0 0.0
      %1158 = vmatprep.subr.mxu0 0.0
      %1159 = vmatpush2.msra.mxu0 0.0
      %1160 = vmatprep.subr.mxu0 0.0
      %1161 = vmatpush2.msra.mxu0 0.0
      %1162 = vmatprep.subr.mxu0 0.0
      %1163 = vmatpush2.msra.mxu0 0.0
      %1164 = vmatprep.subr.mxu0 0.0
      %1165 = vmatpush2.msra.mxu0 0.0
      %1166 = vmatprep.mubr.f32.mxu0 0.0
      %v1167 = vand.u32 %v177, 4294901760
      %v1168 = vsub.f32 %v177, %v1167
      %1169 = vmatmul.mubr.f32.gmra.mxu0 %v1168
      %v1170 = vpop.f32.mrf.mxu0
      %v1171 = vadd.f32 %v1066, %v1170
      %v1172 = vpop.f32.mrf.mxu0
      %v1173 = vadd.f32 %v1068, %v1172
      %1174 = vdwg.mxu0
      %1175 = vmatprep.subr.mxu0 0.0
      %1176 = vmatpush1.msra.mxu0 0.0
      %1177 = vmatprep.subr.mxu0 0.0
      %1178 = vmatpush1.msra.mxu0 0.0
      %1179 = vmatprep.subr.mxu0 0.0
      %1180 = vmatpush1.msra.mxu0 0.0
      %1181 = vmatprep.subr.mxu0 0.0
      %1182 = vmatpush1.msra.mxu0 0.0
      %1183 = vmatprep.subr.mxu0 0.0
      %1184 = vmatpush1.msra.mxu0 0.0
      %1185 = vmatprep.subr.mxu0 0.0
      %1186 = vmatpush1.msra.mxu0 0.0
      %1187 = vmatprep.subr.mxu0 0.0
      %1188 = vmatpush1.msra.mxu0 0.0
      %1189 = vmatprep.subr.mxu0 0.0
      %1190 = vmatpush1.msra.mxu0 0.0
      %v1191 = vand.u32 %v174, 4294901760
      %1192 = vmatprep.subr.mxu0 %v1191
      %v1193 = vand.u32 %v173, 4294901760
      %1194 = vmatpush1.msra.mxu0 %v1193
      %v1195 = vand.u32 %v170, 4294901760
      %1196 = vmatprep.subr.mxu0 %v1195
      %v1197 = vand.u32 %v169, 4294901760
      %1198 = vmatpush1.msra.mxu0 %v1197
      %v1199 = vand.u32 %v166, 4294901760
      %1200 = vmatprep.subr.mxu0 %v1199
      %v1201 = vand.u32 %v165, 4294901760
      %1202 = vmatpush1.msra.mxu0 %v1201
      %v1203 = vand.u32 %v162, 4294901760
      %1204 = vmatprep.subr.mxu0 %v1203
      %v1205 = vand.u32 %v161, 4294901760
      %1206 = vmatpush1.msra.mxu0 %v1205
      %v1207 = vand.u32 %v158, 4294901760
      %1208 = vmatprep.subr.mxu0 %v1207
      %v1209 = vand.u32 %v157, 4294901760
      %1210 = vmatpush1.msra.mxu0 %v1209
      %v1211 = vand.u32 %v154, 4294901760
      %1212 = vmatprep.subr.mxu0 %v1211
      %v1213 = vand.u32 %v153, 4294901760
      %1214 = vmatpush1.msra.mxu0 %v1213
      %v1215 = vand.u32 %v150, 4294901760
      %1216 = vmatprep.subr.mxu0 %v1215
      %v1217 = vand.u32 %v149, 4294901760
      %1218 = vmatpush1.msra.mxu0 %v1217
      %v1219 = vand.u32 %v146, 4294901760
      %1220 = vmatprep.subr.mxu0 %v1219
      %v1221 = vand.u32 %v145, 4294901760
      %1222 = vmatpush1.msra.mxu0 %v1221
      %1223 = vmatprep.subr.mxu0 0.0
      %1224 = vmatpush2.msra.mxu0 0.0
      %1225 = vmatprep.subr.mxu0 0.0
      %1226 = vmatpush2.msra.mxu0 0.0
      %1227 = vmatprep.subr.mxu0 0.0
      %1228 = vmatpush2.msra.mxu0 0.0
      %1229 = vmatprep.subr.mxu0 0.0
      %1230 = vmatpush2.msra.mxu0 0.0
      %1231 = vmatprep.subr.mxu0 0.0
      %1232 = vmatpush2.msra.mxu0 0.0
      %1233 = vmatprep.subr.mxu0 0.0
      %1234 = vmatpush2.msra.mxu0 0.0
      %1235 = vmatprep.subr.mxu0 0.0
      %1236 = vmatpush2.msra.mxu0 0.0
      %1237 = vmatprep.subr.mxu0 0.0
      %1238 = vmatpush2.msra.mxu0 0.0
      %1239 = vmatprep.subr.mxu0 0.0
      %1240 = vmatpush2.msra.mxu0 0.0
      %1241 = vmatprep.subr.mxu0 0.0
      %1242 = vmatpush2.msra.mxu0 0.0
      %1243 = vmatprep.subr.mxu0 0.0
      %1244 = vmatpush2.msra.mxu0 0.0
      %1245 = vmatprep.subr.mxu0 0.0
      %1246 = vmatpush2.msra.mxu0 0.0
      %1247 = vmatprep.subr.mxu0 0.0
      %1248 = vmatpush2.msra.mxu0 0.0
      %1249 = vmatprep.subr.mxu0 0.0
      %1250 = vmatpush2.msra.mxu0 0.0
      %1251 = vmatprep.subr.mxu0 0.0
      %1252 = vmatpush2.msra.mxu0 0.0
      %1253 = vmatprep.subr.mxu0 0.0
      %1254 = vmatpush2.msra.mxu0 0.0
      %1255 = vmatprep.mubr.f32.mxu0 0.0
      %v1256 = vand.u32 %v177, 4294901760
      %v1257 = vsub.f32 %v177, %v1256
      %v1258 = vand.u32 %v1257, 4294901760
      %1259 = vmatmul.mubr.f32.gmra.mxu0 %v1258
      %v1260 = vpop.f32.mrf.mxu0
      %v1261 = vadd.f32 %v1171, %v1260
      %v1262 = vpop.f32.mrf.mxu0
      %v1263 = vadd.f32 %v1173, %v1262
      %1264 = vdwg.mxu0
      %1265 = vmatprep.subr.mxu0 0.0
      %1266 = vmatpush1.msra.mxu0 0.0
      %1267 = vmatprep.subr.mxu0 0.0
      %1268 = vmatpush1.msra.mxu0 0.0
      %1269 = vmatprep.subr.mxu0 0.0
      %1270 = vmatpush1.msra.mxu0 0.0
      %1271 = vmatprep.subr.mxu0 0.0
      %1272 = vmatpush1.msra.mxu0 0.0
      %1273 = vmatprep.subr.mxu0 0.0
      %1274 = vmatpush1.msra.mxu0 0.0
      %1275 = vmatprep.subr.mxu0 0.0
      %1276 = vmatpush1.msra.mxu0 0.0
      %1277 = vmatprep.subr.mxu0 0.0
      %1278 = vmatpush1.msra.mxu0 0.0
      %1279 = vmatprep.subr.mxu0 0.0
      %1280 = vmatpush1.msra.mxu0 0.0
      %v1281 = vand.u32 %v174, 4294901760
      %v1282 = vsub.f32 %v174, %v1281
      %v1283 = vand.u32 %v1282, 4294901760
      %1284 = vmatprep.subr.mxu0 %v1283
      %v1285 = vand.u32 %v173, 4294901760
      %v1286 = vsub.f32 %v173, %v1285
      %v1287 = vand.u32 %v1286, 4294901760
      %1288 = vmatpush1.msra.mxu0 %v1287
      %v1289 = vand.u32 %v170, 4294901760
      %v1290 = vsub.f32 %v170, %v1289
      %v1291 = vand.u32 %v1290, 4294901760
      %1292 = vmatprep.subr.mxu0 %v1291
      %v1293 = vand.u32 %v169, 4294901760
      %v1294 = vsub.f32 %v169, %v1293
      %v1295 = vand.u32 %v1294, 4294901760
      %1296 = vmatpush1.msra.mxu0 %v1295
      %v1297 = vand.u32 %v166, 4294901760
      %v1298 = vsub.f32 %v166, %v1297
      %v1299 = vand.u32 %v1298, 4294901760
      %1300 = vmatprep.subr.mxu0 %v1299
      %v1301 = vand.u32 %v165, 4294901760
      %v1302 = vsub.f32 %v165, %v1301
      %v1303 = vand.u32 %v1302, 4294901760
      %1304 = vmatpush1.msra.mxu0 %v1303
      %v1305 = vand.u32 %v162, 4294901760
      %v1306 = vsub.f32 %v162, %v1305
      %v1307 = vand.u32 %v1306, 4294901760
      %1308 = vmatprep.subr.mxu0 %v1307
      %v1309 = vand.u32 %v161, 4294901760
      %v1310 = vsub.f32 %v161, %v1309
      %v1311 = vand.u32 %v1310, 4294901760
      %1312 = vmatpush1.msra.mxu0 %v1311
      %v1313 = vand.u32 %v158, 4294901760
      %v1314 = vsub.f32 %v158, %v1313
      %v1315 = vand.u32 %v1314, 4294901760
      %1316 = vmatprep.subr.mxu0 %v1315
      %v1317 = vand.u32 %v157, 4294901760
      %v1318 = vsub.f32 %v157, %v1317
      %v1319 = vand.u32 %v1318, 4294901760
      %1320 = vmatpush1.msra.mxu0 %v1319
      %v1321 = vand.u32 %v154, 4294901760
      %v1322 = vsub.f32 %v154, %v1321
      %v1323 = vand.u32 %v1322, 4294901760
      %1324 = vmatprep.subr.mxu0 %v1323
      %v1325 = vand.u32 %v153, 4294901760
      %v1326 = vsub.f32 %v153, %v1325
      %v1327 = vand.u32 %v1326, 4294901760
      %1328 = vmatpush1.msra.mxu0 %v1327
      %v1329 = vand.u32 %v150, 4294901760
      %v1330 = vsub.f32 %v150, %v1329
      %v1331 = vand.u32 %v1330, 4294901760
      %1332 = vmatprep.subr.mxu0 %v1331
      %v1333 = vand.u32 %v149, 4294901760
      %v1334 = vsub.f32 %v149, %v1333
      %v1335 = vand.u32 %v1334, 4294901760
      %1336 = vmatpush1.msra.mxu0 %v1335
      %v1337 = vand.u32 %v146, 4294901760
      %v1338 = vsub.f32 %v146, %v1337
      %v1339 = vand.u32 %v1338, 4294901760
      %1340 = vmatprep.subr.mxu0 %v1339
      %v1341 = vand.u32 %v145, 4294901760
      %v1342 = vsub.f32 %v145, %v1341
      %v1343 = vand.u32 %v1342, 4294901760
      %1344 = vmatpush1.msra.mxu0 %v1343
      %1345 = vmatprep.subr.mxu0 0.0
      %1346 = vmatpush2.msra.mxu0 0.0
      %1347 = vmatprep.subr.mxu0 0.0
      %1348 = vmatpush2.msra.mxu0 0.0
      %1349 = vmatprep.subr.mxu0 0.0
      %1350 = vmatpush2.msra.mxu0 0.0
      %1351 = vmatprep.subr.mxu0 0.0
      %1352 = vmatpush2.msra.mxu0 0.0
      %1353 = vmatprep.subr.mxu0 0.0
      %1354 = vmatpush2.msra.mxu0 0.0
      %1355 = vmatprep.subr.mxu0 0.0
      %1356 = vmatpush2.msra.mxu0 0.0
      %1357 = vmatprep.subr.mxu0 0.0
      %1358 = vmatpush2.msra.mxu0 0.0
      %1359 = vmatprep.subr.mxu0 0.0
      %1360 = vmatpush2.msra.mxu0 0.0
      %1361 = vmatprep.subr.mxu0 0.0
      %1362 = vmatpush2.msra.mxu0 0.0
      %1363 = vmatprep.subr.mxu0 0.0
      %1364 = vmatpush2.msra.mxu0 0.0
      %1365 = vmatprep.subr.mxu0 0.0
      %1366 = vmatpush2.msra.mxu0 0.0
      %1367 = vmatprep.subr.mxu0 0.0
      %1368 = vmatpush2.msra.mxu0 0.0
      %1369 = vmatprep.subr.mxu0 0.0
      %1370 = vmatpush2.msra.mxu0 0.0
      %1371 = vmatprep.subr.mxu0 0.0
      %1372 = vmatpush2.msra.mxu0 0.0
      %1373 = vmatprep.subr.mxu0 0.0
      %1374 = vmatpush2.msra.mxu0 0.0
      %1375 = vmatprep.subr.mxu0 0.0
      %1376 = vmatpush2.msra.mxu0 0.0
      %1377 = vmatprep.mubr.f32.mxu0 0.0
      %v1378 = vand.u32 %v177, 4294901760
      %1379 = vmatmul.mubr.f32.gmra.mxu0 %v1378
      %v1380 = vpop.f32.mrf.mxu0
      %v1381 = vadd.f32 %v1261, %v1380
      %v1382 = vpop.f32.mrf.mxu0
      %v1383 = vadd.f32 %v1263, %v1382
      %1384 = vdwg.mxu0
      %1385 = vmatprep.subr.mxu0 0.0
      %1386 = vmatpush1.msra.mxu0 0.0
      %1387 = vmatprep.subr.mxu0 0.0
      %1388 = vmatpush1.msra.mxu0 0.0
      %1389 = vmatprep.subr.mxu0 0.0
      %1390 = vmatpush1.msra.mxu0 0.0
      %1391 = vmatprep.subr.mxu0 0.0
      %1392 = vmatpush1.msra.mxu0 0.0
      %1393 = vmatprep.subr.mxu0 0.0
      %1394 = vmatpush1.msra.mxu0 0.0
      %1395 = vmatprep.subr.mxu0 0.0
      %1396 = vmatpush1.msra.mxu0 0.0
      %1397 = vmatprep.subr.mxu0 0.0
      %1398 = vmatpush1.msra.mxu0 0.0
      %1399 = vmatprep.subr.mxu0 0.0
      %1400 = vmatpush1.msra.mxu0 0.0
      %v1401 = vand.u32 %v174, 4294901760
      %1402 = vmatprep.subr.mxu0 %v1401
      %v1403 = vand.u32 %v173, 4294901760
      %1404 = vmatpush1.msra.mxu0 %v1403
      %v1405 = vand.u32 %v170, 4294901760
      %1406 = vmatprep.subr.mxu0 %v1405
      %v1407 = vand.u32 %v169, 4294901760
      %1408 = vmatpush1.msra.mxu0 %v1407
      %v1409 = vand.u32 %v166, 4294901760
      %1410 = vmatprep.subr.mxu0 %v1409
      %v1411 = vand.u32 %v165, 4294901760
      %1412 = vmatpush1.msra.mxu0 %v1411
      %v1413 = vand.u32 %v162, 4294901760
      %1414 = vmatprep.subr.mxu0 %v1413
      %v1415 = vand.u32 %v161, 4294901760
      %1416 = vmatpush1.msra.mxu0 %v1415
      %v1417 = vand.u32 %v158, 4294901760
      %1418 = vmatprep.subr.mxu0 %v1417
      %v1419 = vand.u32 %v157, 4294901760
      %1420 = vmatpush1.msra.mxu0 %v1419
      %v1421 = vand.u32 %v154, 4294901760
      %1422 = vmatprep.subr.mxu0 %v1421
      %v1423 = vand.u32 %v153, 4294901760
      %1424 = vmatpush1.msra.mxu0 %v1423
      %v1425 = vand.u32 %v150, 4294901760
      %1426 = vmatprep.subr.mxu0 %v1425
      %v1427 = vand.u32 %v149, 4294901760
      %1428 = vmatpush1.msra.mxu0 %v1427
      %v1429 = vand.u32 %v146, 4294901760
      %1430 = vmatprep.subr.mxu0 %v1429
      %v1431 = vand.u32 %v145, 4294901760
      %1432 = vmatpush1.msra.mxu0 %v1431
      %1433 = vmatprep.subr.mxu0 0.0
      %1434 = vmatpush2.msra.mxu0 0.0
      %1435 = vmatprep.subr.mxu0 0.0
      %1436 = vmatpush2.msra.mxu0 0.0
      %1437 = vmatprep.subr.mxu0 0.0
      %1438 = vmatpush2.msra.mxu0 0.0
      %1439 = vmatprep.subr.mxu0 0.0
      %1440 = vmatpush2.msra.mxu0 0.0
      %1441 = vmatprep.subr.mxu0 0.0
      %1442 = vmatpush2.msra.mxu0 0.0
      %1443 = vmatprep.subr.mxu0 0.0
      %1444 = vmatpush2.msra.mxu0 0.0
      %1445 = vmatprep.subr.mxu0 0.0
      %1446 = vmatpush2.msra.mxu0 0.0
      %1447 = vmatprep.subr.mxu0 0.0
      %1448 = vmatpush2.msra.mxu0 0.0
      %1449 = vmatprep.subr.mxu0 0.0
      %1450 = vmatpush2.msra.mxu0 0.0
      %1451 = vmatprep.subr.mxu0 0.0
      %1452 = vmatpush2.msra.mxu0 0.0
      %1453 = vmatprep.subr.mxu0 0.0
      %1454 = vmatpush2.msra.mxu0 0.0
      %1455 = vmatprep.subr.mxu0 0.0
      %1456 = vmatpush2.msra.mxu0 0.0
      %1457 = vmatprep.subr.mxu0 0.0
      %1458 = vmatpush2.msra.mxu0 0.0
      %1459 = vmatprep.subr.mxu0 0.0
      %1460 = vmatpush2.msra.mxu0 0.0
      %1461 = vmatprep.subr.mxu0 0.0
      %1462 = vmatpush2.msra.mxu0 0.0
      %1463 = vmatprep.subr.mxu0 0.0
      %1464 = vmatpush2.msra.mxu0 0.0
      %1465 = vmatprep.mubr.f32.mxu0 0.0
      %v1466 = vand.u32 %v177, 4294901760
      %1467 = vmatmul.mubr.f32.gmra.mxu0 %v1466
      %v1468 = vpop.f32.mrf.mxu0
      %v1469 = vadd.f32 %v1381, %v1468
      %v1470 = vpop.f32.mrf.mxu0
      %v1471 = vadd.f32 %v1383, %v1470
      %1472 = vdwg.mxu0
      %1473 = vst [vmem:[%s140] sm:$0xff] %v822
      %1474 = vst [vmem:[%s140 + $0x8] sm:$0xff] %v824
      %1475 = vst [vmem:[%s140 + $0x10] sm:$0xff] %v1469
      %1476 = vst [vmem:[%s140 + $0x18] sm:$0xff] %v1471
      %p1477 = scmp.lt.s32.totalorder %s13, 3
      %s1478 = scalar_select %p1477, %s13, 3
      %s1479 = smul.addr %s1478, 4
      %s1480 = smul.addr %s1479, 8
      %s1481 = scalar_lea.vmem %s2, %s1480
      // Predicated region
      $region29: #{transition_block_dy.1} parent=27 // pred_check
        %p1482 = pneg %p78
      $region30: #{transition_block_dy.1} parent=27 // pred_check_branch
        %1484 = sbr.rel (%p1482) target = $region32
      $region31: #{transition_block_dy.1} parent=27 // pred_region
        _
      $region32: #{transition_block_dy.1} parent=27 // pred_fallthru
        _
    $region28: #{transition_block_dy.1} parent=5 // pred_fallthru
      _
    %p1485 = scmp.le.s32.totalorder 2, %s8
    // Predicated region
    $region33: #{transition_block_dy.1} parent=5 // pred_check
      %p1486 = pneg %p1485
    $region34: #{transition_block_dy.1} parent=5 // pred_check_branch
      %1488 = sbr.rel (%p1486) target = $region36
    $region35: #{transition_block_dy.1} parent=5 // pred_region
      %s1489 = ssub.s32 %s8, 2
      // Predicated region
      $region37: #{transition_block_dy.1} parent=35 // pred_check
        %p1490 = pneg %p84
      $region38: #{transition_block_dy.1} parent=35 // pred_check_branch
        %1492 = sbr.rel (%p1490) target = $region40
      $region39: #{transition_block_dy.1} parent=35 // pred_region
        %p1493 = scmp.lt.s32.totalorder %s14, 3
        %s1494 = scalar_select %p1493, %s14, 3
        %s1495 = smul.addr %s1494, 4
        %s1496 = smul.addr %s1495, 8
        %s1497 = scalar_lea.vmem %s2, %s1496
      $region40: #{transition_block_dy.1} parent=35 // pred_fallthru
        _
    $region36: #{transition_block_dy.1} parent=5 // pred_fallthru
      _
  $region6: #{transition_block_dy.1} parent=0 // loop_footer
    %s12 = sadd.s32 1, %s8
  $region7: #{transition_block_dy.1} parent=0 // loop_footer_branch
    %7 = sbr.rel target = $region3
  $region8: #{transition_block_dy.1} parent=0 // loop_exit
    _

</llo_original>
